<compile_context>
chip_gen: v5e
topology: v5e:2x2
jax: 0.10.0
libtpu: 0.0.40
codegen_flags: <defaults>
</compile_context>

<pallas_src>
import jax
import jax.numpy as jnp
from jax.experimental import pallas as pl
from jax.experimental.pallas import tpu as pltpu
import numpy as np


def _lstm_kernel(x_ref, w_xg_ref, b_xg_ref, w_hh_ref, w_out_ref, b_out_ref, o_ref):
    # x_ref    : (Bt, in_size)        activations (f32 or bf16)
    # w_xg_ref : (in_size, T*4D)      folded input-projection x gate weights, order [i,f,o,g]
    # b_xg_ref : (1, T*4D)  f32       folded b_in@W_ih^T + b_ih + b_hh (per timestep)
    # w_hh_ref : (D, 4D)              concatenated recurrent weights (transposed)
    # w_out_ref: (T*D, out_pad)       output projection, lane-dense padded
    # b_out_ref: (1, out_pad) f32
    # o_ref    : (Bt, out_pad) f32
    Bt = x_ref.shape[0]
    D = w_hh_ref.shape[0]
    G = w_hh_ref.shape[1]              # 4 * D
    T = w_xg_ref.shape[1] // G
    cd = w_hh_ref.dtype                # MXU operand dtype (f32 or bf16)

    # (1) All x-side gate preactivations in one matmul; kept as a value (no VMEM
    #     scratch round-trip).  All biases pre-folded.
    zx = jnp.dot(x_ref[...], w_xg_ref[...],
                 preferred_element_type=jnp.float32) + b_xg_ref[...]

    w_hh = w_hh_ref[...]
    w_out = w_out_ref[...]

    h = jnp.zeros((Bt, D), jnp.float32)
    c = jnp.zeros((Bt, D), jnp.float32)
    acc = jnp.zeros((Bt, o_ref.shape[1]), jnp.float32)

    # (2) Python-static time loop: T is a compile-time constant, so every slice below is
    #     static (no dynamic lane indexing).
    for t in range(T):
        gates = zx[:, t * G:(t + 1) * G] + jnp.dot(
            h.astype(cd), w_hh, preferred_element_type=jnp.float32)   # one dot/step
        # Gate order [i, f, o, g]: one wide sigmoid (3D lanes) + one tanh (D lanes).
        s = jax.nn.sigmoid(gates[:, :3 * D])
        g_g = jnp.tanh(gates[:, 3 * D:])
        c = s[:, D:2 * D] * c + s[:, :D] * g_g
        h = s[:, 2 * D:3 * D] * jnp.tanh(c)
        # (3) Output projection accumulated per step (sublane slice of w_out); this dot
        #     is off the h->c dependency chain so it hides under MXU slack.
        acc = acc + jnp.dot(h.astype(cd), w_out[t * D:(t + 1) * D, :],
                            preferred_element_type=jnp.float32)

    o_ref[...] = acc + b_out_ref[...]


def make_config(input_dim, input_len, output_dim, output_len):
    lstm_dim = max(input_dim, output_dim)
    lstm_len = max(input_len, output_len)
    return dict(
        input_dim=input_dim, input_len=input_len,
        output_dim=output_dim, output_len=output_len,
        lstm_dim=lstm_dim, lstm_len=lstm_len,
        in_size=input_len * input_dim,
        out_size=output_len * output_dim,
        lstm_size=lstm_dim * lstm_len,
    )


def init_params(key, cfg):
    """Deterministic parameter init mirroring the shapes of the PyTorch module."""
    D = cfg["lstm_dim"]
    in_size, lstm_size, out_size = cfg["in_size"], cfg["lstm_size"], cfg["out_size"]
    ks = jax.random.split(key, 8)

    def u(k, shape, fan_in):
        b = 1.0 / np.sqrt(fan_in)
        return jax.random.uniform(k, shape, jnp.float32, -b, b)

    return dict(
        # linear_projection_in: Linear(in_size, lstm_size)
        w_in=u(ks[0], (lstm_size, in_size), in_size),
        b_in=u(ks[1], (lstm_size,), in_size),
        # linear_projection_out: Linear(lstm_size, out_size)
        w_out=u(ks[2], (out_size, lstm_size), lstm_size),
        b_out=u(ks[3], (out_size,), lstm_size),
        # nn.LSTM(lstm_dim, lstm_dim, num_layers=1), PyTorch gate order [i, f, g, o]
        w_ih=u(ks[4], (4 * D, D), D),
        w_hh=u(ks[5], (4 * D, D), D),
        b_ih=u(ks[6], (4 * D,), D),
        b_hh=u(ks[7], (4 * D,), D),
    )
    # TODO(synk): only kernel_hidden_layer == 1 implemented (stacked-layer LSTM not built);
    # nn.LSTM dropout is a no-op with a single layer, so it is omitted here.


def _round_up(x, m):
    return ((x + m - 1) // m) * m


def lstm_forward(x, p, cfg, weights_dtype=jnp.float32):
    B = x.shape[0]
    T, D = cfg["lstm_len"], cfg["lstm_dim"]
    in_size, out_size = cfg["in_size"], cfg["out_size"]
    G = 4 * D
    hp = jax.lax.Precision.HIGHEST   # exact wrapper-side weight folding

    # --- one-time parameter re-layout (plain-JAX glue) ---
    # Gate reorder [i, f, g, o] -> [i, f, o, g] so sigmoid/tanh slices are contiguous.
    perm = jnp.array([0, 1, 3, 2])
    w_ih_r = p["w_ih"].reshape(4, D, D)[perm].reshape(G, D)
    w_hh_r = p["w_hh"].reshape(4, D, D)[perm].reshape(G, D)
    b_g = (p["b_ih"] + p["b_hh"]).reshape(4, D)[perm].reshape(G)

    # Fold linear_projection_in through the input-side gate weights:
    #   zx[:, t*G:(t+1)*G] = x @ (W_in[t]^T @ W_ih_r^T) + (b_in[t] @ W_ih_r^T + b_ih + b_hh)
    w_in3 = p["w_in"].reshape(T, D, in_size)                               # (T, D, in_size)
    w_xg = jnp.einsum("tdi,gd->itg", w_in3, w_ih_r,
                      precision=hp).reshape(in_size, T * G)                # (in_size, T*4D)
    b_in2 = p["b_in"].reshape(T, D)
    b_xg = (jnp.einsum("td,gd->tg", b_in2, w_ih_r, precision=hp)
            + b_g[None, :]).reshape(1, T * G)                              # (1, T*4D), f32

    w_hh_cat = w_hh_r.T                                                    # (D, 4D)

    # Lane-dense output: pad out_size up to a multiple of 128.
    out_pad = _round_up(out_size, 128)
    w_out_p = jnp.pad(p["w_out"].T, ((0, 0), (0, out_pad - out_size)))     # (T*D, out_pad)
    b_out_p = jnp.pad(p["b_out"], (0, out_pad - out_size)).reshape(1, out_pad)  # f32

    # Optional bf16 MXU-operand cast (v6e/v7x lever): halves the dominant weight DMA.
    # Biases and all gate/h/c math stay f32.
    w_xg = w_xg.astype(weights_dtype)
    w_hh_cat = w_hh_cat.astype(weights_dtype)
    w_out_p = w_out_p.astype(weights_dtype)

    # --- batch tiling ---
    # Large batches: up to 256-row tiles (fills the 256-row v6e/v7x MXU, 2x the 128-row
    # v5e MXU).  Small batches: split into at least 2 "parallel" grid steps so both v7x
    # TensorCores get work.  Worst-case VMEM at B_TILE=256 (x + zx + acc + out + weights,
    # double-buffered) is ~4 MB -- comfortably inside v7x's 64 MiB physical /
    # 32 MiB scoped-default budget.
    MAX_B_TILE = 256
    B_pad0 = _round_up(B, 8)                       # f32 sublane granule
    if B_pad0 >= 2 * MAX_B_TILE:
        B_TILE = MAX_B_TILE
    else:
        B_TILE = max(8, _round_up(-(-B_pad0 // 2), 8))
    B_pad = max(_round_up(B_pad0, B_TILE), 2 * B_TILE)
    grid = (B_pad // B_TILE,)

    x2 = jnp.pad(x.reshape(B, in_size).astype(jnp.float32),
                 ((0, B_pad - B), (0, 0))).astype(weights_dtype)

    y = pl.pallas_call(
        _lstm_kernel,
        out_shape=jax.ShapeDtypeStruct((B_pad, out_pad), jnp.float32),
        grid=grid,
        in_specs=[
            pl.BlockSpec((B_TILE, in_size), lambda b: (b, 0)),
            pl.BlockSpec((in_size, T * G), lambda b: (0, 0)),
            pl.BlockSpec((1, T * G), lambda b: (0, 0)),
            pl.BlockSpec((D, G), lambda b: (0, 0)),
            pl.BlockSpec((T * D, out_pad), lambda b: (0, 0)),
            pl.BlockSpec((1, out_pad), lambda b: (0, 0)),
        ],
        out_specs=pl.BlockSpec((B_TILE, out_pad), lambda b: (b, 0)),
        compiler_params=pltpu.CompilerParams(
            dimension_semantics=("parallel",),        # shard batch across v7x TCs
            vmem_limit_bytes=32 * 1024 * 1024),       # derived against v7x budget
    )(x2, w_xg, b_xg, w_hh_cat, w_out_p, b_out_p)

    return y[:B, :out_size].reshape(B, cfg["output_len"], cfg["output_dim"])


def reference_forward(x, p, cfg):
    """Pure-JAX reference matching the PyTorch forward (correctness check)."""
    B = x.shape[0]
    D, T = cfg["lstm_dim"], cfg["lstm_len"]
    xf = x.reshape(B, cfg["in_size"])
    z = xf @ p["w_in"].T + p["b_in"]
    z = z.reshape(B, T, D)
    h = jnp.zeros((B, D), jnp.float32)
    c = jnp.zeros((B, D), jnp.float32)
    outs = []
    for t in range(T):
        gates = z[:, t, :] @ p["w_ih"].T + p["b_ih"] + h @ p["w_hh"].T + p["b_hh"]
        i = jax.nn.sigmoid(gates[:, :D])
        f = jax.nn.sigmoid(gates[:, D:2 * D])
        g = jnp.tanh(gates[:, 2 * D:3 * D])
        o = jax.nn.sigmoid(gates[:, 3 * D:])
        c = f * c + i * g
        h = o * jnp.tanh(c)
        outs.append(h)
    seq = jnp.stack(outs, axis=1).reshape(B, cfg["lstm_size"])
    y = seq @ p["w_out"].T + p["b_out"]
    return y.reshape(B, cfg["output_len"], cfg["output_dim"])


if __name__ == "__main__":
    # LSTM(input_dim=32, input_len=8, output_dim=16, output_len=4)
    cfg = make_config(input_dim=32, input_len=8, output_dim=16, output_len=4)
    B = 2

    key = jax.random.PRNGKey(0)
    k_x, k_p = jax.random.split(key)
    x = jax.random.normal(k_x, (B, cfg["input_len"], cfg["input_dim"]), jnp.float32)
    params = init_params(k_p, cfg)

    y_ref = jax.block_until_ready(reference_forward(x, params, cfg))

    # f32 path (v5e default).
    y = jax.block_until_ready(lstm_forward(x, params, cfg, weights_dtype=jnp.float32))
    assert y.shape == (B, cfg["output_len"], cfg["output_dim"])
    np.testing.assert_allclose(np.asarray(y), np.asarray(y_ref), atol=2e-3, rtol=2e-3)

    # bf16 MXU-operand path (v6e/v7x lever); looser tolerance for the bf16 cast.
    y_bf = jax.block_until_ready(lstm_forward(x, params, cfg, weights_dtype=jnp.bfloat16))
    np.testing.assert_allclose(np.asarray(y_bf), np.asarray(y_ref), atol=3e-2, rtol=3e-2)

    print("KERNEL_OK")
</pallas_src>

<mosaic_0001>
module attributes {stable_mosaic.version = 11 : i64} {
  func.func @_lstm_kernel(%arg0: i32, %arg1: memref<8x256xf32, #tpu.memory_space<vmem>>, %arg2: memref<256x1024xf32, #tpu.memory_space<vmem>>, %arg3: memref<1x1024xf32, #tpu.memory_space<vmem>>, %arg4: memref<32x128xf32, #tpu.memory_space<vmem>>, %arg5: memref<256x128xf32, #tpu.memory_space<vmem>>, %arg6: memref<1x128xf32, #tpu.memory_space<vmem>>, %arg7: memref<8x128xf32, #tpu.memory_space<vmem>>) attributes {dimension_semantics = [#tpu.dimension_semantics<parallel>], iteration_bounds = array<i64: 2>, scalar_prefetch = 0 : i64, scratch_operands = 0 : i64, tpu.core_type = #tpu.core_type<tc>, window_params = [{transform_indices = @transform_0, window_bounds = array<i64: 8, 256>}, {pipeline_mode = #tpu.pipeline_mode<synchronous>, transform_indices = @transform_1, window_bounds = array<i64: 256, 1024>}, {pipeline_mode = #tpu.pipeline_mode<synchronous>, transform_indices = @transform_2, window_bounds = array<i64: 1, 1024>}, {pipeline_mode = #tpu.pipeline_mode<synchronous>, transform_indices = @transform_3, window_bounds = array<i64: 32, 128>}, {pipeline_mode = #tpu.pipeline_mode<synchronous>, transform_indices = @transform_4, window_bounds = array<i64: 256, 128>}, {pipeline_mode = #tpu.pipeline_mode<synchronous>, transform_indices = @transform_5, window_bounds = array<i64: 1, 128>}, {transform_indices = @transform_6, window_bounds = array<i64: 8, 128>}]} {
    %c0 = arith.constant 0 : index
    %c0_0 = arith.constant 0 : index
    %0 = vector.load %arg1[%c0, %c0_0] : memref<8x256xf32, #tpu.memory_space<vmem>>, vector<8x256xf32>
    %c0_1 = arith.constant 0 : index
    %c0_2 = arith.constant 0 : index
    %1 = vector.load %arg2[%c0_1, %c0_2] : memref<256x1024xf32, #tpu.memory_space<vmem>>, vector<256x1024xf32>
    %cst = arith.constant dense<0.000000e+00> : vector<8x1024xf32>
    %2 = tpu.matmul %0, %1, %cst {dimension_numbers = #tpu.dot_dimension_numbers<[1], [0], [0], [1], [0, 0, 1, 1], [], []>} : vector<8x256xf32>, vector<256x1024xf32>, vector<8x1024xf32> -> vector<8x1024xf32>
    %c0_3 = arith.constant 0 : index
    %c0_4 = arith.constant 0 : index
    %3 = vector.load %arg3[%c0_3, %c0_4] : memref<1x1024xf32, #tpu.memory_space<vmem>>, vector<1x1024xf32>
    %4 = vector.broadcast %3 : vector<1x1024xf32> to vector<8x1024xf32>
    %5 = arith.addf %2, %4 : vector<8x1024xf32>
    %c0_5 = arith.constant 0 : index
    %c0_6 = arith.constant 0 : index
    %6 = vector.load %arg4[%c0_5, %c0_6] : memref<32x128xf32, #tpu.memory_space<vmem>>, vector<32x128xf32>
    %c0_7 = arith.constant 0 : index
    %c0_8 = arith.constant 0 : index
    %7 = vector.load %arg5[%c0_7, %c0_8] : memref<256x128xf32, #tpu.memory_space<vmem>>, vector<256x128xf32>
    %cst_9 = arith.constant 0.000000e+00 : f32
    %8 = vector.broadcast %cst_9 : f32 to vector<8x32xf32>
    %cst_10 = arith.constant 0.000000e+00 : f32
    %9 = vector.broadcast %cst_10 : f32 to vector<8x32xf32>
    %cst_11 = arith.constant 0.000000e+00 : f32
    %10 = vector.broadcast %cst_11 : f32 to vector<8x128xf32>
    %11 = vector.extract_strided_slice %5 {offsets = [0, 0], sizes = [8, 128], strides = [1, 1]} : vector<8x1024xf32> to vector<8x128xf32>
    %cst_12 = arith.constant dense<0.000000e+00> : vector<8x128xf32>
    %12 = tpu.matmul %8, %6, %cst_12 {dimension_numbers = #tpu.dot_dimension_numbers<[1], [0], [0], [1], [0, 0, 1, 1], [], []>} : vector<8x32xf32>, vector<32x128xf32>, vector<8x128xf32> -> vector<8x128xf32>
    %13 = arith.addf %11, %12 : vector<8x128xf32>
    %14 = vector.extract_strided_slice %13 {offsets = [0, 0], sizes = [8, 96], strides = [1, 1]} : vector<8x128xf32> to vector<8x96xf32>
    %15 = arith.negf %14 : vector<8x96xf32>
    %16 = math.exp %15 : vector<8x96xf32>
    %cst_13 = arith.constant 1.000000e+00 : f32
    %17 = vector.broadcast %cst_13 : f32 to vector<8x96xf32>
    %18 = arith.addf %17, %16 : vector<8x96xf32>
    %19 = arith.divf %17, %18 : vector<8x96xf32>
    %20 = vector.extract_strided_slice %13 {offsets = [0, 96], sizes = [8, 32], strides = [1, 1]} : vector<8x128xf32> to vector<8x32xf32>
    %21 = math.tanh %20 : vector<8x32xf32>
    %22 = vector.extract_strided_slice %19 {offsets = [0, 32], sizes = [8, 32], strides = [1, 1]} : vector<8x96xf32> to vector<8x32xf32>
    %23 = arith.mulf %22, %9 : vector<8x32xf32>
    %24 = vector.extract_strided_slice %19 {offsets = [0, 0], sizes = [8, 32], strides = [1, 1]} : vector<8x96xf32> to vector<8x32xf32>
    %25 = arith.mulf %24, %21 : vector<8x32xf32>
    %26 = arith.addf %23, %25 : vector<8x32xf32>
    %27 = vector.extract_strided_slice %19 {offsets = [0, 64], sizes = [8, 32], strides = [1, 1]} : vector<8x96xf32> to vector<8x32xf32>
    %28 = math.tanh %26 : vector<8x32xf32>
    %29 = arith.mulf %27, %28 : vector<8x32xf32>
    %30 = vector.extract_strided_slice %7 {offsets = [0, 0], sizes = [32, 128], strides = [1, 1]} : vector<256x128xf32> to vector<32x128xf32>
    %cst_14 = arith.constant dense<0.000000e+00> : vector<8x128xf32>
    %31 = tpu.matmul %29, %30, %cst_14 {dimension_numbers = #tpu.dot_dimension_numbers<[1], [0], [0], [1], [0, 0, 1, 1], [], []>} : vector<8x32xf32>, vector<32x128xf32>, vector<8x128xf32> -> vector<8x128xf32>
    %32 = arith.addf %10, %31 : vector<8x128xf32>
    %33 = vector.extract_strided_slice %5 {offsets = [0, 128], sizes = [8, 128], strides = [1, 1]} : vector<8x1024xf32> to vector<8x128xf32>
    %cst_15 = arith.constant dense<0.000000e+00> : vector<8x128xf32>
    %34 = tpu.matmul %29, %6, %cst_15 {dimension_numbers = #tpu.dot_dimension_numbers<[1], [0], [0], [1], [0, 0, 1, 1], [], []>} : vector<8x32xf32>, vector<32x128xf32>, vector<8x128xf32> -> vector<8x128xf32>
    %35 = arith.addf %33, %34 : vector<8x128xf32>
    %36 = vector.extract_strided_slice %35 {offsets = [0, 0], sizes = [8, 96], strides = [1, 1]} : vector<8x128xf32> to vector<8x96xf32>
    %37 = arith.negf %36 : vector<8x96xf32>
    %38 = math.exp %37 : vector<8x96xf32>
    %cst_16 = arith.constant 1.000000e+00 : f32
    %39 = vector.broadcast %cst_16 : f32 to vector<8x96xf32>
    %40 = arith.addf %39, %38 : vector<8x96xf32>
    %41 = arith.divf %39, %40 : vector<8x96xf32>
    %42 = vector.extract_strided_slice %35 {offsets = [0, 96], sizes = [8, 32], strides = [1, 1]} : vector<8x128xf32> to vector<8x32xf32>
    %43 = math.tanh %42 : vector<8x32xf32>
    %44 = vector.extract_strided_slice %41 {offsets = [0, 32], sizes = [8, 32], strides = [1, 1]} : vector<8x96xf32> to vector<8x32xf32>
    %45 = arith.mulf %44, %26 : vector<8x32xf32>
    %46 = vector.extract_strided_slice %41 {offsets = [0, 0], sizes = [8, 32], strides = [1, 1]} : vector<8x96xf32> to vector<8x32xf32>
    %47 = arith.mulf %46, %43 : vector<8x32xf32>
    %48 = arith.addf %45, %47 : vector<8x32xf32>
    %49 = vector.extract_strided_slice %41 {offsets = [0, 64], sizes = [8, 32], strides = [1, 1]} : vector<8x96xf32> to vector<8x32xf32>
    %50 = math.tanh %48 : vector<8x32xf32>
    %51 = arith.mulf %49, %50 : vector<8x32xf32>
    %52 = vector.extract_strided_slice %7 {offsets = [32, 0], sizes = [32, 128], strides = [1, 1]} : vector<256x128xf32> to vector<32x128xf32>
    %cst_17 = arith.constant dense<0.000000e+00> : vector<8x128xf32>
    %53 = tpu.matmul %51, %52, %cst_17 {dimension_numbers = #tpu.dot_dimension_numbers<[1], [0], [0], [1], [0, 0, 1, 1], [], []>} : vector<8x32xf32>, vector<32x128xf32>, vector<8x128xf32> -> vector<8x128xf32>
    %54 = arith.addf %32, %53 : vector<8x128xf32>
    %55 = vector.extract_strided_slice %5 {offsets = [0, 256], sizes = [8, 128], strides = [1, 1]} : vector<8x1024xf32> to vector<8x128xf32>
    %cst_18 = arith.constant dense<0.000000e+00> : vector<8x128xf32>
    %56 = tpu.matmul %51, %6, %cst_18 {dimension_numbers = #tpu.dot_dimension_numbers<[1], [0], [0], [1], [0, 0, 1, 1], [], []>} : vector<8x32xf32>, vector<32x128xf32>, vector<8x128xf32> -> vector<8x128xf32>
    %57 = arith.addf %55, %56 : vector<8x128xf32>
    %58 = vector.extract_strided_slice %57 {offsets = [0, 0], sizes = [8, 96], strides = [1, 1]} : vector<8x128xf32> to vector<8x96xf32>
    %59 = arith.negf %58 : vector<8x96xf32>
    %60 = math.exp %59 : vector<8x96xf32>
    %cst_19 = arith.constant 1.000000e+00 : f32
    %61 = vector.broadcast %cst_19 : f32 to vector<8x96xf32>
    %62 = arith.addf %61, %60 : vector<8x96xf32>
    %63 = arith.divf %61, %62 : vector<8x96xf32>
    %64 = vector.extract_strided_slice %57 {offsets = [0, 96], sizes = [8, 32], strides = [1, 1]} : vector<8x128xf32> to vector<8x32xf32>
    %65 = math.tanh %64 : vector<8x32xf32>
    %66 = vector.extract_strided_slice %63 {offsets = [0, 32], sizes = [8, 32], strides = [1, 1]} : vector<8x96xf32> to vector<8x32xf32>
    %67 = arith.mulf %66, %48 : vector<8x32xf32>
    %68 = vector.extract_strided_slice %63 {offsets = [0, 0], sizes = [8, 32], strides = [1, 1]} : vector<8x96xf32> to vector<8x32xf32>
    %69 = arith.mulf %68, %65 : vector<8x32xf32>
    %70 = arith.addf %67, %69 : vector<8x32xf32>
    %71 = vector.extract_strided_slice %63 {offsets = [0, 64], sizes = [8, 32], strides = [1, 1]} : vector<8x96xf32> to vector<8x32xf32>
    %72 = math.tanh %70 : vector<8x32xf32>
    %73 = arith.mulf %71, %72 : vector<8x32xf32>
    %74 = vector.extract_strided_slice %7 {offsets = [64, 0], sizes = [32, 128], strides = [1, 1]} : vector<256x128xf32> to vector<32x128xf32>
    %cst_20 = arith.constant dense<0.000000e+00> : vector<8x128xf32>
    %75 = tpu.matmul %73, %74, %cst_20 {dimension_numbers = #tpu.dot_dimension_numbers<[1], [0], [0], [1], [0, 0, 1, 1], [], []>} : vector<8x32xf32>, vector<32x128xf32>, vector<8x128xf32> -> vector<8x128xf32>
    %76 = arith.addf %54, %75 : vector<8x128xf32>
    %77 = vector.extract_strided_slice %5 {offsets = [0, 384], sizes = [8, 128], strides = [1, 1]} : vector<8x1024xf32> to vector<8x128xf32>
    %cst_21 = arith.constant dense<0.000000e+00> : vector<8x128xf32>
    %78 = tpu.matmul %73, %6, %cst_21 {dimension_numbers = #tpu.dot_dimension_numbers<[1], [0], [0], [1], [0, 0, 1, 1], [], []>} : vector<8x32xf32>, vector<32x128xf32>, vector<8x128xf32> -> vector<8x128xf32>
    %79 = arith.addf %77, %78 : vector<8x128xf32>
    %80 = vector.extract_strided_slice %79 {offsets = [0, 0], sizes = [8, 96], strides = [1, 1]} : vector<8x128xf32> to vector<8x96xf32>
    %81 = arith.negf %80 : vector<8x96xf32>
    %82 = math.exp %81 : vector<8x96xf32>
    %cst_22 = arith.constant 1.000000e+00 : f32
    %83 = vector.broadcast %cst_22 : f32 to vector<8x96xf32>
    %84 = arith.addf %83, %82 : vector<8x96xf32>
    %85 = arith.divf %83, %84 : vector<8x96xf32>
    %86 = vector.extract_strided_slice %79 {offsets = [0, 96], sizes = [8, 32], strides = [1, 1]} : vector<8x128xf32> to vector<8x32xf32>
    %87 = math.tanh %86 : vector<8x32xf32>
    %88 = vector.extract_strided_slice %85 {offsets = [0, 32], sizes = [8, 32], strides = [1, 1]} : vector<8x96xf32> to vector<8x32xf32>
    %89 = arith.mulf %88, %70 : vector<8x32xf32>
    %90 = vector.extract_strided_slice %85 {offsets = [0, 0], sizes = [8, 32], strides = [1, 1]} : vector<8x96xf32> to vector<8x32xf32>
    %91 = arith.mulf %90, %87 : vector<8x32xf32>
    %92 = arith.addf %89, %91 : vector<8x32xf32>
    %93 = vector.extract_strided_slice %85 {offsets = [0, 64], sizes = [8, 32], strides = [1, 1]} : vector<8x96xf32> to vector<8x32xf32>
    %94 = math.tanh %92 : vector<8x32xf32>
    %95 = arith.mulf %93, %94 : vector<8x32xf32>
    %96 = vector.extract_strided_slice %7 {offsets = [96, 0], sizes = [32, 128], strides = [1, 1]} : vector<256x128xf32> to vector<32x128xf32>
    %cst_23 = arith.constant dense<0.000000e+00> : vector<8x128xf32>
    %97 = tpu.matmul %95, %96, %cst_23 {dimension_numbers = #tpu.dot_dimension_numbers<[1], [0], [0], [1], [0, 0, 1, 1], [], []>} : vector<8x32xf32>, vector<32x128xf32>, vector<8x128xf32> -> vector<8x128xf32>
    %98 = arith.addf %76, %97 : vector<8x128xf32>
    %99 = vector.extract_strided_slice %5 {offsets = [0, 512], sizes = [8, 128], strides = [1, 1]} : vector<8x1024xf32> to vector<8x128xf32>
    %cst_24 = arith.constant dense<0.000000e+00> : vector<8x128xf32>
    %100 = tpu.matmul %95, %6, %cst_24 {dimension_numbers = #tpu.dot_dimension_numbers<[1], [0], [0], [1], [0, 0, 1, 1], [], []>} : vector<8x32xf32>, vector<32x128xf32>, vector<8x128xf32> -> vector<8x128xf32>
    %101 = arith.addf %99, %100 : vector<8x128xf32>
    %102 = vector.extract_strided_slice %101 {offsets = [0, 0], sizes = [8, 96], strides = [1, 1]} : vector<8x128xf32> to vector<8x96xf32>
    %103 = arith.negf %102 : vector<8x96xf32>
    %104 = math.exp %103 : vector<8x96xf32>
    %cst_25 = arith.constant 1.000000e+00 : f32
    %105 = vector.broadcast %cst_25 : f32 to vector<8x96xf32>
    %106 = arith.addf %105, %104 : vector<8x96xf32>
    %107 = arith.divf %105, %106 : vector<8x96xf32>
    %108 = vector.extract_strided_slice %101 {offsets = [0, 96], sizes = [8, 32], strides = [1, 1]} : vector<8x128xf32> to vector<8x32xf32>
    %109 = math.tanh %108 : vector<8x32xf32>
    %110 = vector.extract_strided_slice %107 {offsets = [0, 32], sizes = [8, 32], strides = [1, 1]} : vector<8x96xf32> to vector<8x32xf32>
    %111 = arith.mulf %110, %92 : vector<8x32xf32>
    %112 = vector.extract_strided_slice %107 {offsets = [0, 0], sizes = [8, 32], strides = [1, 1]} : vector<8x96xf32> to vector<8x32xf32>
    %113 = arith.mulf %112, %109 : vector<8x32xf32>
    %114 = arith.addf %111, %113 : vector<8x32xf32>
    %115 = vector.extract_strided_slice %107 {offsets = [0, 64], sizes = [8, 32], strides = [1, 1]} : vector<8x96xf32> to vector<8x32xf32>
    %116 = math.tanh %114 : vector<8x32xf32>
    %117 = arith.mulf %115, %116 : vector<8x32xf32>
    %118 = vector.extract_strided_slice %7 {offsets = [128, 0], sizes = [32, 128], strides = [1, 1]} : vector<256x128xf32> to vector<32x128xf32>
    %cst_26 = arith.constant dense<0.000000e+00> : vector<8x128xf32>
    %119 = tpu.matmul %117, %118, %cst_26 {dimension_numbers = #tpu.dot_dimension_numbers<[1], [0], [0], [1], [0, 0, 1, 1], [], []>} : vector<8x32xf32>, vector<32x128xf32>, vector<8x128xf32> -> vector<8x128xf32>
    %120 = arith.addf %98, %119 : vector<8x128xf32>
    %121 = vector.extract_strided_slice %5 {offsets = [0, 640], sizes = [8, 128], strides = [1, 1]} : vector<8x1024xf32> to vector<8x128xf32>
    %cst_27 = arith.constant dense<0.000000e+00> : vector<8x128xf32>
    %122 = tpu.matmul %117, %6, %cst_27 {dimension_numbers = #tpu.dot_dimension_numbers<[1], [0], [0], [1], [0, 0, 1, 1], [], []>} : vector<8x32xf32>, vector<32x128xf32>, vector<8x128xf32> -> vector<8x128xf32>
    %123 = arith.addf %121, %122 : vector<8x128xf32>
    %124 = vector.extract_strided_slice %123 {offsets = [0, 0], sizes = [8, 96], strides = [1, 1]} : vector<8x128xf32> to vector<8x96xf32>
    %125 = arith.negf %124 : vector<8x96xf32>
    %126 = math.exp %125 : vector<8x96xf32>
    %cst_28 = arith.constant 1.000000e+00 : f32
    %127 = vector.broadcast %cst_28 : f32 to vector<8x96xf32>
    %128 = arith.addf %127, %126 : vector<8x96xf32>
    %129 = arith.divf %127, %128 : vector<8x96xf32>
    %130 = vector.extract_strided_slice %123 {offsets = [0, 96], sizes = [8, 32], strides = [1, 1]} : vector<8x128xf32> to vector<8x32xf32>
    %131 = math.tanh %130 : vector<8x32xf32>
    %132 = vector.extract_strided_slice %129 {offsets = [0, 32], sizes = [8, 32], strides = [1, 1]} : vector<8x96xf32> to vector<8x32xf32>
    %133 = arith.mulf %132, %114 : vector<8x32xf32>
    %134 = vector.extract_strided_slice %129 {offsets = [0, 0], sizes = [8, 32], strides = [1, 1]} : vector<8x96xf32> to vector<8x32xf32>
    %135 = arith.mulf %134, %131 : vector<8x32xf32>
    %136 = arith.addf %133, %135 : vector<8x32xf32>
    %137 = vector.extract_strided_slice %129 {offsets = [0, 64], sizes = [8, 32], strides = [1, 1]} : vector<8x96xf32> to vector<8x32xf32>
    %138 = math.tanh %136 : vector<8x32xf32>
    %139 = arith.mulf %137, %138 : vector<8x32xf32>
    %140 = vector.extract_strided_slice %7 {offsets = [160, 0], sizes = [32, 128], strides = [1, 1]} : vector<256x128xf32> to vector<32x128xf32>
    %cst_29 = arith.constant dense<0.000000e+00> : vector<8x128xf32>
    %141 = tpu.matmul %139, %140, %cst_29 {dimension_numbers = #tpu.dot_dimension_numbers<[1], [0], [0], [1], [0, 0, 1, 1], [], []>} : vector<8x32xf32>, vector<32x128xf32>, vector<8x128xf32> -> vector<8x128xf32>
    %142 = arith.addf %120, %141 : vector<8x128xf32>
    %143 = vector.extract_strided_slice %5 {offsets = [0, 768], sizes = [8, 128], strides = [1, 1]} : vector<8x1024xf32> to vector<8x128xf32>
    %cst_30 = arith.constant dense<0.000000e+00> : vector<8x128xf32>
    %144 = tpu.matmul %139, %6, %cst_30 {dimension_numbers = #tpu.dot_dimension_numbers<[1], [0], [0], [1], [0, 0, 1, 1], [], []>} : vector<8x32xf32>, vector<32x128xf32>, vector<8x128xf32> -> vector<8x128xf32>
    %145 = arith.addf %143, %144 : vector<8x128xf32>
    %146 = vector.extract_strided_slice %145 {offsets = [0, 0], sizes = [8, 96], strides = [1, 1]} : vector<8x128xf32> to vector<8x96xf32>
    %147 = arith.negf %146 : vector<8x96xf32>
    %148 = math.exp %147 : vector<8x96xf32>
    %cst_31 = arith.constant 1.000000e+00 : f32
    %149 = vector.broadcast %cst_31 : f32 to vector<8x96xf32>
    %150 = arith.addf %149, %148 : vector<8x96xf32>
    %151 = arith.divf %149, %150 : vector<8x96xf32>
    %152 = vector.extract_strided_slice %145 {offsets = [0, 96], sizes = [8, 32], strides = [1, 1]} : vector<8x128xf32> to vector<8x32xf32>
    %153 = math.tanh %152 : vector<8x32xf32>
    %154 = vector.extract_strided_slice %151 {offsets = [0, 32], sizes = [8, 32], strides = [1, 1]} : vector<8x96xf32> to vector<8x32xf32>
    %155 = arith.mulf %154, %136 : vector<8x32xf32>
    %156 = vector.extract_strided_slice %151 {offsets = [0, 0], sizes = [8, 32], strides = [1, 1]} : vector<8x96xf32> to vector<8x32xf32>
    %157 = arith.mulf %156, %153 : vector<8x32xf32>
    %158 = arith.addf %155, %157 : vector<8x32xf32>
    %159 = vector.extract_strided_slice %151 {offsets = [0, 64], sizes = [8, 32], strides = [1, 1]} : vector<8x96xf32> to vector<8x32xf32>
    %160 = math.tanh %158 : vector<8x32xf32>
    %161 = arith.mulf %159, %160 : vector<8x32xf32>
    %162 = vector.extract_strided_slice %7 {offsets = [192, 0], sizes = [32, 128], strides = [1, 1]} : vector<256x128xf32> to vector<32x128xf32>
    %cst_32 = arith.constant dense<0.000000e+00> : vector<8x128xf32>
    %163 = tpu.matmul %161, %162, %cst_32 {dimension_numbers = #tpu.dot_dimension_numbers<[1], [0], [0], [1], [0, 0, 1, 1], [], []>} : vector<8x32xf32>, vector<32x128xf32>, vector<8x128xf32> -> vector<8x128xf32>
    %164 = arith.addf %142, %163 : vector<8x128xf32>
    %165 = vector.extract_strided_slice %5 {offsets = [0, 896], sizes = [8, 128], strides = [1, 1]} : vector<8x1024xf32> to vector<8x128xf32>
    %cst_33 = arith.constant dense<0.000000e+00> : vector<8x128xf32>
    %166 = tpu.matmul %161, %6, %cst_33 {dimension_numbers = #tpu.dot_dimension_numbers<[1], [0], [0], [1], [0, 0, 1, 1], [], []>} : vector<8x32xf32>, vector<32x128xf32>, vector<8x128xf32> -> vector<8x128xf32>
    %167 = arith.addf %165, %166 : vector<8x128xf32>
    %168 = vector.extract_strided_slice %167 {offsets = [0, 0], sizes = [8, 96], strides = [1, 1]} : vector<8x128xf32> to vector<8x96xf32>
    %169 = arith.negf %168 : vector<8x96xf32>
    %170 = math.exp %169 : vector<8x96xf32>
    %cst_34 = arith.constant 1.000000e+00 : f32
    %171 = vector.broadcast %cst_34 : f32 to vector<8x96xf32>
    %172 = arith.addf %171, %170 : vector<8x96xf32>
    %173 = arith.divf %171, %172 : vector<8x96xf32>
    %174 = vector.extract_strided_slice %167 {offsets = [0, 96], sizes = [8, 32], strides = [1, 1]} : vector<8x128xf32> to vector<8x32xf32>
    %175 = math.tanh %174 : vector<8x32xf32>
    %176 = vector.extract_strided_slice %173 {offsets = [0, 32], sizes = [8, 32], strides = [1, 1]} : vector<8x96xf32> to vector<8x32xf32>
    %177 = arith.mulf %176, %158 : vector<8x32xf32>
    %178 = vector.extract_strided_slice %173 {offsets = [0, 0], sizes = [8, 32], strides = [1, 1]} : vector<8x96xf32> to vector<8x32xf32>
    %179 = arith.mulf %178, %175 : vector<8x32xf32>
    %180 = arith.addf %177, %179 : vector<8x32xf32>
    %181 = vector.extract_strided_slice %173 {offsets = [0, 64], sizes = [8, 32], strides = [1, 1]} : vector<8x96xf32> to vector<8x32xf32>
    %182 = math.tanh %180 : vector<8x32xf32>
    %183 = arith.mulf %181, %182 : vector<8x32xf32>
    %184 = vector.extract_strided_slice %7 {offsets = [224, 0], sizes = [32, 128], strides = [1, 1]} : vector<256x128xf32> to vector<32x128xf32>
    %cst_35 = arith.constant dense<0.000000e+00> : vector<8x128xf32>
    %185 = tpu.matmul %183, %184, %cst_35 {dimension_numbers = #tpu.dot_dimension_numbers<[1], [0], [0], [1], [0, 0, 1, 1], [], []>} : vector<8x32xf32>, vector<32x128xf32>, vector<8x128xf32> -> vector<8x128xf32>
    %186 = arith.addf %164, %185 : vector<8x128xf32>
    %c0_36 = arith.constant 0 : index
    %c0_37 = arith.constant 0 : index
    %187 = vector.load %arg6[%c0_36, %c0_37] : memref<1x128xf32, #tpu.memory_space<vmem>>, vector<1x128xf32>
    %188 = vector.broadcast %187 : vector<1x128xf32> to vector<8x128xf32>
    %189 = arith.addf %186, %188 : vector<8x128xf32>
    %c0_38 = arith.constant 0 : index
    %c0_39 = arith.constant 0 : index
    %190 = vector.load %arg7[%c0_38, %c0_39] : memref<8x128xf32, #tpu.memory_space<vmem>>, vector<8x128xf32>
    tpu.vector_store %arg7[%c0_38, %c0_39], %189 {strides = array<i32>} : memref<8x128xf32, #tpu.memory_space<vmem>>, vector<8x128xf32>,
    return
  }
  func.func @transform_0(%arg0: i32) -> (i32, i32) {
    %c0_i32 = arith.constant 0 : i32
    %c0_i32_0 = arith.constant 0 : i32
    return %arg0, %c0_i32 : i32, i32
  }
  func.func @transform_1(%arg0: i32) -> (i32, i32) {
    %c0_i32 = arith.constant 0 : i32
    %c0_i32_0 = arith.constant 0 : i32
    %c0_i32_1 = arith.constant 0 : i32
    return %c0_i32, %c0_i32_0 : i32, i32
  }
  func.func @transform_2(%arg0: i32) -> (i32, i32) {
    %c0_i32 = arith.constant 0 : i32
    %c0_i32_0 = arith.constant 0 : i32
    %c0_i32_1 = arith.constant 0 : i32
    return %c0_i32, %c0_i32_0 : i32, i32
  }
  func.func @transform_3(%arg0: i32) -> (i32, i32) {
    %c0_i32 = arith.constant 0 : i32
    %c0_i32_0 = arith.constant 0 : i32
    %c0_i32_1 = arith.constant 0 : i32
    return %c0_i32, %c0_i32_0 : i32, i32
  }
  func.func @transform_4(%arg0: i32) -> (i32, i32) {
    %c0_i32 = arith.constant 0 : i32
    %c0_i32_0 = arith.constant 0 : i32
    %c0_i32_1 = arith.constant 0 : i32
    return %c0_i32, %c0_i32_0 : i32, i32
  }
  func.func @transform_5(%arg0: i32) -> (i32, i32) {
    %c0_i32 = arith.constant 0 : i32
    %c0_i32_0 = arith.constant 0 : i32
    %c0_i32_1 = arith.constant 0 : i32
    return %c0_i32, %c0_i32_0 : i32, i32
  }
  func.func @transform_6(%arg0: i32) -> (i32, i32) {
    %c0_i32 = arith.constant 0 : i32
    %c0_i32_0 = arith.constant 0 : i32
    return %arg0, %c0_i32 : i32, i32
  }
}

</mosaic_0001>

<llo_original>
// kernel: tpu_custom_call.1
$region0: #{tpu_custom_call.1}
  #allocation0 [shape = 'u32[]', space=smem, size = 0x4, offset = 0x4, fixed_abs, tag = 'smem constant byte address 0x4 - core index']
  #allocation1 [shape = 'u32[72,128]{1,0:T(1,128)}', space=vmem, size = 0x9000, scoped, tag = 'internal scratch']
  %s0 = inlined_call_operand.hbm [shape: f32[16,256], index: 0, kind: input, shape index: {}]
  %s1 = inlined_call_operand.hbm [shape: f32[256,1024], index: 1, kind: input, shape index: {}]
  %s2 = inlined_call_operand.hbm [shape: f32[1,1024], index: 2, kind: input, shape index: {}]
  %s3 = inlined_call_operand.hbm [shape: f32[32,128], index: 3, kind: input, shape index: {}]
  %s4 = inlined_call_operand.hbm [shape: f32[256,128], index: 4, kind: input, shape index: {}]
  %s5 = inlined_call_operand.vmem [shape: f32[1,128], index: 5, kind: input, shape index: {}]
  %s6 = inlined_call_operand.hbm [shape: f32[16,128], index: 6, kind: output, shape index: {}]
  %s7 = sld [smem:[#allocation0]]
  $region77: #{tpu_custom_call.1} parent=0
    _
  %s9 = ssub.s32 1, %s7
  %s10 = scalar_select 0, %s9, %s7
  $region1: #{tpu_custom_call.1} parent=0
    #allocation2 [shape = 'u8[16384]{0}', space=vmem, size = 0x4000, scoped, tag = 'input window, operand 0']
    #allocation3 [shape = 's32[2]{0}', space=sflag, size = 0x8, scoped, tag = 'scoped memory for tpu_custom_call.1']
    #allocation4 [shape = 's32[2]{0}', space=sflag, size = 0x8, scoped, tag = 'scoped memory for tpu_custom_call.1']
    #allocation5 [shape = 'u8[1048576]{0}', space=vmem, size = 0x100000, scoped, tag = 'input window, operand 1, single buffered']
    #allocation6 [shape = 's32[1]{0}', space=sflag, size = 0x4, scoped, tag = 'scoped memory for tpu_custom_call.1']
    #allocation7 [shape = 'u8[4096]{0}', space=vmem, size = 0x1000, scoped, tag = 'input window, operand 2, single buffered']
    #allocation8 [shape = 'u8[16384]{0}', space=vmem, size = 0x4000, scoped, tag = 'input window, operand 3, single buffered']
    #allocation9 [shape = 's32[1]{0}', space=sflag, size = 0x4, scoped, tag = 'scoped memory for tpu_custom_call.1']
    #allocation10 [shape = 'u8[131072]{0}', space=vmem, size = 0x20000, scoped, tag = 'input window, operand 4, single buffered']
    #allocation11 [shape = 'u8[8192]{0}', space=vmem, size = 0x2000, scoped, tag = 'output window, operand 0']
    %11 = vsyncpa [#allocation3], 0
    %s12 = scalar_lea.sflag [#allocation3], 1
    %13 = vsyncpa %s12, 0
    %14 = vsyncpa [#allocation6], 0
    %15 = vsyncpa [#allocation9], 0
    %16 = vsyncpa [#allocation4], 0
    %s17 = scalar_lea.sflag [#allocation4], 1
    %18 = vsyncpa %s17, 0
    loop: start=0, step=1, limit=4
    $region2: #{tpu_custom_call.1} parent=1 // loop_pre_header
      _
    $region3: #{tpu_custom_call.1} parent=1 // loop_header
      %s20 = sphi 0, %s24
      %p21 = scmp.ge.s32.totalorder %s20, 4
      %s30 = sphi 0, %s32
      %s33 = sphi 0, %s30
      %s34 = sphi 0, %s33
      %s50 = sphi 0, %s34
      %s54 = sphi 0, %s54
      %s56 = sphi 0, %s54
      %s57 = sphi 0, %s56
      %s71 = sphi 0, %s57
      %s75 = sphi 0, %s75
      %s77 = sphi 0, %s75
      %s78 = sphi 0, %s77
      %s92 = sphi 0, %s78
      %s96 = sphi 0, %s96
      %s98 = sphi 0, %s96
      %s99 = sphi 0, %s98
      %s113 = sphi 0, %s99
      %s117 = sphi 0, %s117
      %s119 = sphi 0, %s117
      %s120 = sphi 0, %s119
      %s134 = sphi 0, %s120
      %s138 = sphi 0, %s138
      %s140 = sphi 0, %s138
      %s141 = sphi 0, %s140
      %s155 = sphi 0, %s141
      %s161 = sphi 0, %s163
      %s164 = sphi 0, %s161
      %s165 = sphi 0, %s164
      %s181 = sphi 0, %s165
    $region4: #{tpu_custom_call.1} parent=1 // loop_header_branch
      %23 = sbr.rel (%p21) target = $region8
    $region5: #{tpu_custom_call.1} parent=1 // loop_body
      %s25 = ssub.s32 %s20, 1
      %s26 = ssub.s32 %s20, 2
      %s27 = sadd.s32 %s20, 1
      %s28 = ssub.s32 %s20, %s27
      %p29 = scmp.eq.s32.totalorder %s28, 0
      %s31 = sadd.s32 %s30, 1
      %s32 = scalar_select %p29, %s30, %s31
      %p35 = pneg %p29
      %p36 = scmp.eq.s32.totalorder %s20, 1
      %p37 = por %p35, %p36
      %p38 = scmp.ne.s32.totalorder %s30, %s33
      %p39 = scmp.eq.s32.totalorder %s20, 0
      %p40 = por %p38, %p39
      %p41 = scmp.ne.s32.totalorder %s30, %s33
      %p42 = scmp.eq.s32.totalorder %s25, 1
      %p43 = por %p41, %p42
      %p44 = scmp.ne.s32.totalorder %s33, %s34
      %p45 = scmp.eq.s32.totalorder %s25, 0
      %p46 = por %p44, %p45
      %p47 = scmp.ne.s32.totalorder %s33, %s34
      %p48 = scmp.eq.s32.totalorder %s26, 1
      %p49 = por %p47, %p48
      %p51 = scmp.ne.s32.totalorder %s34, %s50
      %p52 = scmp.eq.s32.totalorder %s26, 0
      %p53 = por %p51, %p52
      %s55 = sadd.s32 %s54, 1
      %p58 = scmp.eq.s32.totalorder %s20, 1
      %p59 = scmp.ne.s32.totalorder %s54, %s56
      %p60 = scmp.eq.s32.totalorder %s20, 0
      %p61 = por %p59, %p60
      %p62 = scmp.ne.s32.totalorder %s54, %s56
      %p63 = scmp.eq.s32.totalorder %s25, 1
      %p64 = por %p62, %p63
      %p65 = scmp.ne.s32.totalorder %s56, %s57
      %p66 = scmp.eq.s32.totalorder %s25, 0
      %p67 = por %p65, %p66
      %p68 = scmp.ne.s32.totalorder %s56, %s57
      %p69 = scmp.eq.s32.totalorder %s26, 1
      %p70 = por %p68, %p69
      %p72 = scmp.ne.s32.totalorder %s57, %s71
      %p73 = scmp.eq.s32.totalorder %s26, 0
      %p74 = por %p72, %p73
      %s76 = sadd.s32 %s75, 1
      %p79 = scmp.eq.s32.totalorder %s20, 1
      %p80 = scmp.ne.s32.totalorder %s75, %s77
      %p81 = scmp.eq.s32.totalorder %s20, 0
      %p82 = por %p80, %p81
      %p83 = scmp.ne.s32.totalorder %s75, %s77
      %p84 = scmp.eq.s32.totalorder %s25, 1
      %p85 = por %p83, %p84
      %p86 = scmp.ne.s32.totalorder %s77, %s78
      %p87 = scmp.eq.s32.totalorder %s25, 0
      %p88 = por %p86, %p87
      %p89 = scmp.ne.s32.totalorder %s77, %s78
      %p90 = scmp.eq.s32.totalorder %s26, 1
      %p91 = por %p89, %p90
      %p93 = scmp.ne.s32.totalorder %s78, %s92
      %p94 = scmp.eq.s32.totalorder %s26, 0
      %p95 = por %p93, %p94
      %s97 = sadd.s32 %s96, 1
      %p100 = scmp.eq.s32.totalorder %s20, 1
      %p101 = scmp.ne.s32.totalorder %s96, %s98
      %p102 = scmp.eq.s32.totalorder %s20, 0
      %p103 = por %p101, %p102
      %p104 = scmp.ne.s32.totalorder %s96, %s98
      %p105 = scmp.eq.s32.totalorder %s25, 1
      %p106 = por %p104, %p105
      %p107 = scmp.ne.s32.totalorder %s98, %s99
      %p108 = scmp.eq.s32.totalorder %s25, 0
      %p109 = por %p107, %p108
      %p110 = scmp.ne.s32.totalorder %s98, %s99
      %p111 = scmp.eq.s32.totalorder %s26, 1
      %p112 = por %p110, %p111
      %p114 = scmp.ne.s32.totalorder %s99, %s113
      %p115 = scmp.eq.s32.totalorder %s26, 0
      %p116 = por %p114, %p115
      %s118 = sadd.s32 %s117, 1
      %p121 = scmp.eq.s32.totalorder %s20, 1
      %p122 = scmp.ne.s32.totalorder %s117, %s119
      %p123 = scmp.eq.s32.totalorder %s20, 0
      %p124 = por %p122, %p123
      %p125 = scmp.ne.s32.totalorder %s117, %s119
      %p126 = scmp.eq.s32.totalorder %s25, 1
      %p127 = por %p125, %p126
      %p128 = scmp.ne.s32.totalorder %s119, %s120
      %p129 = scmp.eq.s32.totalorder %s25, 0
      %p130 = por %p128, %p129
      %p131 = scmp.ne.s32.totalorder %s119, %s120
      %p132 = scmp.eq.s32.totalorder %s26, 1
      %p133 = por %p131, %p132
      %p135 = scmp.ne.s32.totalorder %s120, %s134
      %p136 = scmp.eq.s32.totalorder %s26, 0
      %p137 = por %p135, %p136
      %s139 = sadd.s32 %s138, 1
      %p142 = scmp.eq.s32.totalorder %s20, 1
      %p143 = scmp.ne.s32.totalorder %s138, %s140
      %p144 = scmp.eq.s32.totalorder %s20, 0
      %p145 = por %p143, %p144
      %p146 = scmp.ne.s32.totalorder %s138, %s140
      %p147 = scmp.eq.s32.totalorder %s25, 1
      %p148 = por %p146, %p147
      %p149 = scmp.ne.s32.totalorder %s140, %s141
      %p150 = scmp.eq.s32.totalorder %s25, 0
      %p151 = por %p149, %p150
      %p152 = scmp.ne.s32.totalorder %s140, %s141
      %p153 = scmp.eq.s32.totalorder %s26, 1
      %p154 = por %p152, %p153
      %p156 = scmp.ne.s32.totalorder %s141, %s155
      %p157 = scmp.eq.s32.totalorder %s26, 0
      %p158 = por %p156, %p157
      %s159 = ssub.s32 %s20, %s27
      %p160 = scmp.eq.s32.totalorder %s159, 0
      %s162 = sadd.s32 %s161, 1
      %s163 = scalar_select %p160, %s161, %s162
      %p166 = pneg %p160
      %p167 = scmp.eq.s32.totalorder %s20, 1
      %p168 = por %p166, %p167
      %p169 = scmp.ne.s32.totalorder %s161, %s164
      %p170 = scmp.eq.s32.totalorder %s20, 0
      %p171 = por %p169, %p170
      %p172 = scmp.ne.s32.totalorder %s161, %s164
      %p173 = scmp.eq.s32.totalorder %s25, 1
      %p174 = por %p172, %p173
      %p175 = scmp.ne.s32.totalorder %s164, %s165
      %p176 = scmp.eq.s32.totalorder %s25, 0
      %p177 = por %p175, %p176
      %p178 = scmp.ne.s32.totalorder %s164, %s165
      %p179 = scmp.eq.s32.totalorder %s26, 1
      %p180 = por %p178, %p179
      %p182 = scmp.ne.s32.totalorder %s165, %s181
      %p183 = scmp.eq.s32.totalorder %s26, 0
      %p184 = por %p182, %p183
      %p185 = scmp.le.s32.totalorder 1, %s20
      %p186 = scmp.lt.s32.totalorder %s20, 3
      %p187 = pnand %p185, %p186
      %p188 = pneg %p187
      // Predicated region
      $region9: #{tpu_custom_call.1} parent=5 // pred_check
        _
      $region10: #{tpu_custom_call.1} parent=5 // pred_check_branch
        %190 = sbr.rel (%p187) target = $region12
      $region11: #{tpu_custom_call.1} parent=5 // pred_region
        %s191 = ssub.s32 %s20, 1
        // Predicated region
        $region13: #{tpu_custom_call.1} parent=11 // pred_check
          %p192 = pneg %p67
        $region14: #{tpu_custom_call.1} parent=11 // pred_check_branch
          %194 = sbr.rel (%p192) target = $region16
        $region15: #{tpu_custom_call.1} parent=11 // pred_region
          %196 = vsyncadd [#allocation6], 0
          %s197 = sshll.u32 %s1, 4
          %s198 = int_to_ptr.hbm [resolvable:$true] %s197
          %s199 = sshll.u32 [#allocation5], 4
          %s200 = int_to_ptr.vmem [resolvable:$true] %s199
          %205 = dma.hbm_to_vmem [thread:$0]  %s198, 32768, %s200, [#allocation6], 1024, 1024, 64
        $region16: #{tpu_custom_call.1} parent=11 // pred_fallthru
          _
        // Predicated region
        $region17: #{tpu_custom_call.1} parent=11 // pred_check
          %p206 = pneg %p88
        $region18: #{tpu_custom_call.1} parent=11 // pred_check_branch
          %208 = sbr.rel (%p206) target = $region20
        $region19: #{tpu_custom_call.1} parent=11 // pred_region
          %210 = vsyncadd [#allocation6], 0
          %s212 = sshll.u32 %s2, 4
          %s213 = int_to_ptr.hbm [resolvable:$true] %s212
          %s214 = sshll.u32 [#allocation7], 4
          %s215 = int_to_ptr.vmem [resolvable:$true] %s214
          %217 = dma.hbm_to_vmem [thread:$0]  %s213, 128, %s215, [#allocation6]
        $region20: #{tpu_custom_call.1} parent=11 // pred_fallthru
          _
        // Predicated region
        $region21: #{tpu_custom_call.1} parent=11 // pred_check
          %p218 = pneg %p109
        $region22: #{tpu_custom_call.1} parent=11 // pred_check_branch
          %220 = sbr.rel (%p218) target = $region24
        $region23: #{tpu_custom_call.1} parent=11 // pred_region
          %222 = vsyncadd [#allocation9], 0
          %s223 = sshll.u32 %s3, 4
          %s224 = int_to_ptr.hbm [resolvable:$true] %s223
          %s225 = sshll.u32 [#allocation8], 4
          %s226 = int_to_ptr.vmem [resolvable:$true] %s225
          %231 = dma.hbm_to_vmem [thread:$0]  %s224, 512, %s226, [#allocation9], 128, 128, 8
        $region24: #{tpu_custom_call.1} parent=11 // pred_fallthru
          _
        // Predicated region
        $region25: #{tpu_custom_call.1} parent=11 // pred_check
          %p232 = pneg %p130
        $region26: #{tpu_custom_call.1} parent=11 // pred_check_branch
          %234 = sbr.rel (%p232) target = $region28
        $region27: #{tpu_custom_call.1} parent=11 // pred_region
          %236 = vsyncadd [#allocation9], 0
          %s237 = sshll.u32 %s4, 4
          %s238 = int_to_ptr.hbm [resolvable:$true] %s237
          %s239 = sshll.u32 [#allocation10], 4
          %s240 = int_to_ptr.vmem [resolvable:$true] %s239
          %245 = dma.hbm_to_vmem [thread:$0]  %s238, 4096, %s240, [#allocation9], 128, 128, 8
        $region28: #{tpu_custom_call.1} parent=11 // pred_fallthru
          _
        // Predicated region
        $region29: #{tpu_custom_call.1} parent=11 // pred_check
          %p246 = pneg %p151
        $region30: #{tpu_custom_call.1} parent=11 // pred_check_branch
          %248 = sbr.rel (%p246) target = $region32
        $region31: #{tpu_custom_call.1} parent=11 // pred_region
          _
        $region32: #{tpu_custom_call.1} parent=11 // pred_fallthru
          _
      $region12: #{tpu_custom_call.1} parent=5 // pred_fallthru
        _
      %p249 = scmp.lt.s32.totalorder %s20, 2
      // Predicated region
      $region33: #{tpu_custom_call.1} parent=5 // pred_check
        %p250 = pneg %p249
      $region34: #{tpu_custom_call.1} parent=5 // pred_check_branch
        %252 = sbr.rel (%p250) target = $region36
      $region35: #{tpu_custom_call.1} parent=5 // pred_region
        // Predicated region
        $region37: #{tpu_custom_call.1} parent=35 // pred_check
          %p253 = pneg %p40
        $region38: #{tpu_custom_call.1} parent=35 // pred_check_branch
          %255 = sbr.rel (%p253) target = $region40
        $region39: #{tpu_custom_call.1} parent=35 // pred_region
          %s256 = sand.u32 %s30, 1
          %s257 = scalar_lea.sflag [#allocation3], %s256
          %s258 = sand.u32 %s30, 1
          %s259 = smul.addr %s258, 16
          %s260 = scalar_lea.vmem [#allocation2], %s259
          %262 = vsyncadd %s257, 0
          %s263 = smul.addr %s20, 2
          %s264 = smul.addr %s263, 8
          %s265 = scalar_lea.hbm %s0, %s264
          %s267 = sshll.u32 %s265, 4
          %s268 = int_to_ptr.hbm [resolvable:$true] %s267
          %s269 = sshll.u32 %s260, 4
          %s270 = int_to_ptr.vmem [resolvable:$true] %s269
          %272 = dma.hbm_to_vmem [thread:$0]  %s268, 256, %s270, %s257
        $region40: #{tpu_custom_call.1} parent=35 // pred_fallthru
          _
      $region36: #{tpu_custom_call.1} parent=5 // pred_fallthru
        _
      %p273 = scmp.le.s32.totalorder 1, %s20
      %p274 = scmp.lt.s32.totalorder %s20, 3
      %p275 = pnand %p273, %p274
      %p276 = pneg %p275
      // Predicated region
      $region41: #{tpu_custom_call.1} parent=5 // pred_check
        _
      $region42: #{tpu_custom_call.1} parent=5 // pred_check_branch
        %278 = sbr.rel (%p275) target = $region44
      $region43: #{tpu_custom_call.1} parent=5 // pred_region
        %s279 = ssub.s32 %s20, 1
        %s280 = sand.u32 %s33, 1
        %s281 = scalar_lea.sflag [#allocation3], %s280
        %s282 = sand.u32 %s33, 1
        %s283 = smul.addr %s282, 16
        %s284 = scalar_lea.vmem [#allocation2], %s283
        // Predicated region
        $region45: #{tpu_custom_call.1} parent=43 // pred_check
          %p285 = pneg %p46
        $region46: #{tpu_custom_call.1} parent=43 // pred_check_branch
          %287 = sbr.rel (%p285) target = $region48
        $region47: #{tpu_custom_call.1} parent=43 // pred_region
          %289 = dma.done %s281, 256
        $region48: #{tpu_custom_call.1} parent=43 // pred_fallthru
          _
        // Predicated region
        $region49: #{tpu_custom_call.1} parent=43 // pred_check
          %p290 = pneg %p67
        $region50: #{tpu_custom_call.1} parent=43 // pred_check_branch
          %292 = sbr.rel (%p290) target = $region52
        $region51: #{tpu_custom_call.1} parent=43 // pred_region
          %294 = dma.done [#allocation6], 32768
        $region52: #{tpu_custom_call.1} parent=43 // pred_fallthru
          _
        // Predicated region
        $region53: #{tpu_custom_call.1} parent=43 // pred_check
          %p295 = pneg %p88
        $region54: #{tpu_custom_call.1} parent=43 // pred_check_branch
          %297 = sbr.rel (%p295) target = $region56
        $region55: #{tpu_custom_call.1} parent=43 // pred_region
          %299 = dma.done [#allocation6], 128
        $region56: #{tpu_custom_call.1} parent=43 // pred_fallthru
          _
        // Predicated region
        $region57: #{tpu_custom_call.1} parent=43 // pred_check
          %p300 = pneg %p109
        $region58: #{tpu_custom_call.1} parent=43 // pred_check_branch
          %302 = sbr.rel (%p300) target = $region60
        $region59: #{tpu_custom_call.1} parent=43 // pred_region
          %304 = dma.done [#allocation9], 512
        $region60: #{tpu_custom_call.1} parent=43 // pred_fallthru
          _
        // Predicated region
        $region61: #{tpu_custom_call.1} parent=43 // pred_check
          %p305 = pneg %p130
        $region62: #{tpu_custom_call.1} parent=43 // pred_check_branch
          %307 = sbr.rel (%p305) target = $region64
        $region63: #{tpu_custom_call.1} parent=43 // pred_region
          %309 = dma.done [#allocation9], 4096
        $region64: #{tpu_custom_call.1} parent=43 // pred_fallthru
          _
        %s310 = sand.u32 %s33, 1
        %s311 = scalar_lea.sflag [#allocation3], %s310
        %s312 = sand.u32 %s33, 1
        %s313 = smul.addr %s312, 16
        %s314 = scalar_lea.vmem [#allocation2], %s313
        %p315 = pneg %p46
        %p316 = pneg %p43
        %p317 = pneg %p67
        %p318 = pneg %p64
        %p319 = pneg %p88
        %p320 = pneg %p85
        %p321 = pneg %p109
        %p322 = pneg %p106
        %p323 = pneg %p130
        %p324 = pneg %p127
        %p325 = pneg %p151
        %p326 = pneg %p148
        %p327 = pneg %p177
        %p328 = pneg %p174
        %s329 = sand.u32 %s164, 1
        %s330 = scalar_lea.sflag [#allocation4], %s329
        %s331 = sand.u32 %s164, 1
        %s332 = smul.addr %s331, 8
        %s333 = scalar_lea.vmem [#allocation11], %s332
        %v334 = vld [vmem:[%s284] sm:$0xff]
        %v335 = vld [vmem:[%s284 + $0x8] sm:$0xff]
        %v336 = vld [vmem:[#allocation5] sm:$0xff]
        %v337 = vld [vmem:[#allocation5 + $0x8] sm:$0xff]
        %v338 = vld [vmem:[#allocation5 + $0x10] sm:$0xff]
        %v339 = vld [vmem:[#allocation5 + $0x18] sm:$0xff]
        %v340 = vld [vmem:[#allocation5 + $0x20] sm:$0xff]
        %v341 = vld [vmem:[#allocation5 + $0x28] sm:$0xff]
        %v342 = vld [vmem:[#allocation5 + $0x30] sm:$0xff]
        %v343 = vld [vmem:[#allocation5 + $0x38] sm:$0xff]
        %v344 = vld [vmem:[#allocation5 + $0x40] sm:$0xff]
        %v345 = vld [vmem:[#allocation5 + $0x48] sm:$0xff]
        %v346 = vld [vmem:[#allocation5 + $0x50] sm:$0xff]
        %v347 = vld [vmem:[#allocation5 + $0x58] sm:$0xff]
        %v348 = vld [vmem:[#allocation5 + $0x60] sm:$0xff]
        %v349 = vld [vmem:[#allocation5 + $0x68] sm:$0xff]
        %v350 = vld [vmem:[#allocation5 + $0x70] sm:$0xff]
        %v351 = vld [vmem:[#allocation5 + $0x78] sm:$0xff]
        %v352 = vld [vmem:[#allocation5 + $0x80] sm:$0xff]
        %v353 = vld [vmem:[#allocation5 + $0x88] sm:$0xff]
        %v354 = vld [vmem:[#allocation5 + $0x90] sm:$0xff]
        %v355 = vld [vmem:[#allocation5 + $0x98] sm:$0xff]
        %v356 = vld [vmem:[#allocation5 + $0xa0] sm:$0xff]
        %v357 = vld [vmem:[#allocation5 + $0xa8] sm:$0xff]
        %v358 = vld [vmem:[#allocation5 + $0xb0] sm:$0xff]
        %v359 = vld [vmem:[#allocation5 + $0xb8] sm:$0xff]
        %v360 = vld [vmem:[#allocation5 + $0xc0] sm:$0xff]
        %v361 = vld [vmem:[#allocation5 + $0xc8] sm:$0xff]
        %v362 = vld [vmem:[#allocation5 + $0xd0] sm:$0xff]
        %v363 = vld [vmem:[#allocation5 + $0xd8] sm:$0xff]
        %v364 = vld [vmem:[#allocation5 + $0xe0] sm:$0xff]
        %v365 = vld [vmem:[#allocation5 + $0xe8] sm:$0xff]
        %v366 = vld [vmem:[#allocation5 + $0xf0] sm:$0xff]
        %v367 = vld [vmem:[#allocation5 + $0xf8] sm:$0xff]
        %v368 = vld [vmem:[#allocation5 + $0x100] sm:$0xff]
        %v369 = vld [vmem:[#allocation5 + $0x108] sm:$0xff]
        %v370 = vld [vmem:[#allocation5 + $0x110] sm:$0xff]
        %v371 = vld [vmem:[#allocation5 + $0x118] sm:$0xff]
        %v372 = vld [vmem:[#allocation5 + $0x120] sm:$0xff]
        %v373 = vld [vmem:[#allocation5 + $0x128] sm:$0xff]
        %v374 = vld [vmem:[#allocation5 + $0x130] sm:$0xff]
        %v375 = vld [vmem:[#allocation5 + $0x138] sm:$0xff]
        %v376 = vld [vmem:[#allocation5 + $0x140] sm:$0xff]
        %v377 = vld [vmem:[#allocation5 + $0x148] sm:$0xff]
        %v378 = vld [vmem:[#allocation5 + $0x150] sm:$0xff]
        %v379 = vld [vmem:[#allocation5 + $0x158] sm:$0xff]
        %v380 = vld [vmem:[#allocation5 + $0x160] sm:$0xff]
        %v381 = vld [vmem:[#allocation5 + $0x168] sm:$0xff]
        %v382 = vld [vmem:[#allocation5 + $0x170] sm:$0xff]
        %v383 = vld [vmem:[#allocation5 + $0x178] sm:$0xff]
        %v384 = vld [vmem:[#allocation5 + $0x180] sm:$0xff]
        %v385 = vld [vmem:[#allocation5 + $0x188] sm:$0xff]
        %v386 = vld [vmem:[#allocation5 + $0x190] sm:$0xff]
        %v387 = vld [vmem:[#allocation5 + $0x198] sm:$0xff]
        %v388 = vld [vmem:[#allocation5 + $0x1a0] sm:$0xff]
        %v389 = vld [vmem:[#allocation5 + $0x1a8] sm:$0xff]
        %v390 = vld [vmem:[#allocation5 + $0x1b0] sm:$0xff]
        %v391 = vld [vmem:[#allocation5 + $0x1b8] sm:$0xff]
        %v392 = vld [vmem:[#allocation5 + $0x1c0] sm:$0xff]
        %v393 = vld [vmem:[#allocation5 + $0x1c8] sm:$0xff]
        %v394 = vld [vmem:[#allocation5 + $0x1d0] sm:$0xff]
        %v395 = vld [vmem:[#allocation5 + $0x1d8] sm:$0xff]
        %v396 = vld [vmem:[#allocation5 + $0x1e0] sm:$0xff]
        %v397 = vld [vmem:[#allocation5 + $0x1e8] sm:$0xff]
        %v398 = vld [vmem:[#allocation5 + $0x1f0] sm:$0xff]
        %v399 = vld [vmem:[#allocation5 + $0x1f8] sm:$0xff]
        %v400 = vld [vmem:[#allocation5 + $0x200] sm:$0xff]
        %v401 = vld [vmem:[#allocation5 + $0x208] sm:$0xff]
        %v402 = vld [vmem:[#allocation5 + $0x210] sm:$0xff]
        %v403 = vld [vmem:[#allocation5 + $0x218] sm:$0xff]
        %v404 = vld [vmem:[#allocation5 + $0x220] sm:$0xff]
        %v405 = vld [vmem:[#allocation5 + $0x228] sm:$0xff]
        %v406 = vld [vmem:[#allocation5 + $0x230] sm:$0xff]
        %v407 = vld [vmem:[#allocation5 + $0x238] sm:$0xff]
        %v408 = vld [vmem:[#allocation5 + $0x240] sm:$0xff]
        %v409 = vld [vmem:[#allocation5 + $0x248] sm:$0xff]
        %v410 = vld [vmem:[#allocation5 + $0x250] sm:$0xff]
        %v411 = vld [vmem:[#allocation5 + $0x258] sm:$0xff]
        %v412 = vld [vmem:[#allocation5 + $0x260] sm:$0xff]
        %v413 = vld [vmem:[#allocation5 + $0x268] sm:$0xff]
        %v414 = vld [vmem:[#allocation5 + $0x270] sm:$0xff]
        %v415 = vld [vmem:[#allocation5 + $0x278] sm:$0xff]
        %v416 = vld [vmem:[#allocation5 + $0x280] sm:$0xff]
        %v417 = vld [vmem:[#allocation5 + $0x288] sm:$0xff]
        %v418 = vld [vmem:[#allocation5 + $0x290] sm:$0xff]
        %v419 = vld [vmem:[#allocation5 + $0x298] sm:$0xff]
        %v420 = vld [vmem:[#allocation5 + $0x2a0] sm:$0xff]
        %v421 = vld [vmem:[#allocation5 + $0x2a8] sm:$0xff]
        %v422 = vld [vmem:[#allocation5 + $0x2b0] sm:$0xff]
        %v423 = vld [vmem:[#allocation5 + $0x2b8] sm:$0xff]
        %v424 = vld [vmem:[#allocation5 + $0x2c0] sm:$0xff]
        %v425 = vld [vmem:[#allocation5 + $0x2c8] sm:$0xff]
        %v426 = vld [vmem:[#allocation5 + $0x2d0] sm:$0xff]
        %v427 = vld [vmem:[#allocation5 + $0x2d8] sm:$0xff]
        %v428 = vld [vmem:[#allocation5 + $0x2e0] sm:$0xff]
        %v429 = vld [vmem:[#allocation5 + $0x2e8] sm:$0xff]
        %v430 = vld [vmem:[#allocation5 + $0x2f0] sm:$0xff]
        %v431 = vld [vmem:[#allocation5 + $0x2f8] sm:$0xff]
        %v432 = vld [vmem:[#allocation5 + $0x300] sm:$0xff]
        %v433 = vld [vmem:[#allocation5 + $0x308] sm:$0xff]
        %v434 = vld [vmem:[#allocation5 + $0x310] sm:$0xff]
        %v435 = vld [vmem:[#allocation5 + $0x318] sm:$0xff]
        %v436 = vld [vmem:[#allocation5 + $0x320] sm:$0xff]
        %v437 = vld [vmem:[#allocation5 + $0x328] sm:$0xff]
        %v438 = vld [vmem:[#allocation5 + $0x330] sm:$0xff]
        %v439 = vld [vmem:[#allocation5 + $0x338] sm:$0xff]
        %v440 = vld [vmem:[#allocation5 + $0x340] sm:$0xff]
        %v441 = vld [vmem:[#allocation5 + $0x348] sm:$0xff]
        %v442 = vld [vmem:[#allocation5 + $0x350] sm:$0xff]
        %v443 = vld [vmem:[#allocation5 + $0x358] sm:$0xff]
        %v444 = vld [vmem:[#allocation5 + $0x360] sm:$0xff]
        %v445 = vld [vmem:[#allocation5 + $0x368] sm:$0xff]
        %v446 = vld [vmem:[#allocation5 + $0x370] sm:$0xff]
        %v447 = vld [vmem:[#allocation5 + $0x378] sm:$0xff]
        %v448 = vld [vmem:[#allocation5 + $0x380] sm:$0xff]
        %v449 = vld [vmem:[#allocation5 + $0x388] sm:$0xff]
        %v450 = vld [vmem:[#allocation5 + $0x390] sm:$0xff]
        %v451 = vld [vmem:[#allocation5 + $0x398] sm:$0xff]
        %v452 = vld [vmem:[#allocation5 + $0x3a0] sm:$0xff]
        %v453 = vld [vmem:[#allocation5 + $0x3a8] sm:$0xff]
        %v454 = vld [vmem:[#allocation5 + $0x3b0] sm:$0xff]
        %v455 = vld [vmem:[#allocation5 + $0x3b8] sm:$0xff]
        %v456 = vld [vmem:[#allocation5 + $0x3c0] sm:$0xff]
        %v457 = vld [vmem:[#allocation5 + $0x3c8] sm:$0xff]
        %v458 = vld [vmem:[#allocation5 + $0x3d0] sm:$0xff]
        %v459 = vld [vmem:[#allocation5 + $0x3d8] sm:$0xff]
        %v460 = vld [vmem:[#allocation5 + $0x3e0] sm:$0xff]
        %v461 = vld [vmem:[#allocation5 + $0x3e8] sm:$0xff]
        %v462 = vld [vmem:[#allocation5 + $0x3f0] sm:$0xff]
        %v463 = vld [vmem:[#allocation5 + $0x3f8] sm:$0xff]
        %v464 = vld [vmem:[#allocation5 + $0x400] sm:$0xff]
        %v465 = vld [vmem:[#allocation5 + $0x408] sm:$0xff]
        %v466 = vld [vmem:[#allocation5 + $0x410] sm:$0xff]
        %v467 = vld [vmem:[#allocation5 + $0x418] sm:$0xff]
        %v468 = vld [vmem:[#allocation5 + $0x420] sm:$0xff]
        %v469 = vld [vmem:[#allocation5 + $0x428] sm:$0xff]
        %v470 = vld [vmem:[#allocation5 + $0x430] sm:$0xff]
        %v471 = vld [vmem:[#allocation5 + $0x438] sm:$0xff]
        %v472 = vld [vmem:[#allocation5 + $0x440] sm:$0xff]
        %v473 = vld [vmem:[#allocation5 + $0x448] sm:$0xff]
        %v474 = vld [vmem:[#allocation5 + $0x450] sm:$0xff]
        %v475 = vld [vmem:[#allocation5 + $0x458] sm:$0xff]
        %v476 = vld [vmem:[#allocation5 + $0x460] sm:$0xff]
        %v477 = vld [vmem:[#allocation5 + $0x468] sm:$0xff]
        %v478 = vld [vmem:[#allocation5 + $0x470] sm:$0xff]
        %v479 = vld [vmem:[#allocation5 + $0x478] sm:$0xff]
        %v480 = vld [vmem:[#allocation5 + $0x480] sm:$0xff]
        %v481 = vld [vmem:[#allocation5 + $0x488] sm:$0xff]
        %v482 = vld [vmem:[#allocation5 + $0x490] sm:$0xff]
        %v483 = vld [vmem:[#allocation5 + $0x498] sm:$0xff]
        %v484 = vld [vmem:[#allocation5 + $0x4a0] sm:$0xff]
        %v485 = vld [vmem:[#allocation5 + $0x4a8] sm:$0xff]
        %v486 = vld [vmem:[#allocation5 + $0x4b0] sm:$0xff]
        %v487 = vld [vmem:[#allocation5 + $0x4b8] sm:$0xff]
        %v488 = vld [vmem:[#allocation5 + $0x4c0] sm:$0xff]
        %v489 = vld [vmem:[#allocation5 + $0x4c8] sm:$0xff]
        %v490 = vld [vmem:[#allocation5 + $0x4d0] sm:$0xff]
        %v491 = vld [vmem:[#allocation5 + $0x4d8] sm:$0xff]
        %v492 = vld [vmem:[#allocation5 + $0x4e0] sm:$0xff]
        %v493 = vld [vmem:[#allocation5 + $0x4e8] sm:$0xff]
        %v494 = vld [vmem:[#allocation5 + $0x4f0] sm:$0xff]
        %v495 = vld [vmem:[#allocation5 + $0x4f8] sm:$0xff]
        %v496 = vld [vmem:[#allocation5 + $0x500] sm:$0xff]
        %v497 = vld [vmem:[#allocation5 + $0x508] sm:$0xff]
        %v498 = vld [vmem:[#allocation5 + $0x510] sm:$0xff]
        %v499 = vld [vmem:[#allocation5 + $0x518] sm:$0xff]
        %v500 = vld [vmem:[#allocation5 + $0x520] sm:$0xff]
        %v501 = vld [vmem:[#allocation5 + $0x528] sm:$0xff]
        %v502 = vld [vmem:[#allocation5 + $0x530] sm:$0xff]
        %v503 = vld [vmem:[#allocation5 + $0x538] sm:$0xff]
        %v504 = vld [vmem:[#allocation5 + $0x540] sm:$0xff]
        %v505 = vld [vmem:[#allocation5 + $0x548] sm:$0xff]
        %v506 = vld [vmem:[#allocation5 + $0x550] sm:$0xff]
        %v507 = vld [vmem:[#allocation5 + $0x558] sm:$0xff]
        %v508 = vld [vmem:[#allocation5 + $0x560] sm:$0xff]
        %v509 = vld [vmem:[#allocation5 + $0x568] sm:$0xff]
        %v510 = vld [vmem:[#allocation5 + $0x570] sm:$0xff]
        %v511 = vld [vmem:[#allocation5 + $0x578] sm:$0xff]
        %v512 = vld [vmem:[#allocation5 + $0x580] sm:$0xff]
        %v513 = vld [vmem:[#allocation5 + $0x588] sm:$0xff]
        %v514 = vld [vmem:[#allocation5 + $0x590] sm:$0xff]
        %v515 = vld [vmem:[#allocation5 + $0x598] sm:$0xff]
        %v516 = vld [vmem:[#allocation5 + $0x5a0] sm:$0xff]
        %v517 = vld [vmem:[#allocation5 + $0x5a8] sm:$0xff]
        %v518 = vld [vmem:[#allocation5 + $0x5b0] sm:$0xff]
        %v519 = vld [vmem:[#allocation5 + $0x5b8] sm:$0xff]
        %v520 = vld [vmem:[#allocation5 + $0x5c0] sm:$0xff]
        %v521 = vld [vmem:[#allocation5 + $0x5c8] sm:$0xff]
        %v522 = vld [vmem:[#allocation5 + $0x5d0] sm:$0xff]
        %v523 = vld [vmem:[#allocation5 + $0x5d8] sm:$0xff]
        %v524 = vld [vmem:[#allocation5 + $0x5e0] sm:$0xff]
        %v525 = vld [vmem:[#allocation5 + $0x5e8] sm:$0xff]
        %v526 = vld [vmem:[#allocation5 + $0x5f0] sm:$0xff]
        %v527 = vld [vmem:[#allocation5 + $0x5f8] sm:$0xff]
        %v528 = vld [vmem:[#allocation5 + $0x600] sm:$0xff]
        %v529 = vld [vmem:[#allocation5 + $0x608] sm:$0xff]
        %v530 = vld [vmem:[#allocation5 + $0x610] sm:$0xff]
        %v531 = vld [vmem:[#allocation5 + $0x618] sm:$0xff]
        %v532 = vld [vmem:[#allocation5 + $0x620] sm:$0xff]
        %v533 = vld [vmem:[#allocation5 + $0x628] sm:$0xff]
        %v534 = vld [vmem:[#allocation5 + $0x630] sm:$0xff]
        %v535 = vld [vmem:[#allocation5 + $0x638] sm:$0xff]
        %v536 = vld [vmem:[#allocation5 + $0x640] sm:$0xff]
        %v537 = vld [vmem:[#allocation5 + $0x648] sm:$0xff]
        %v538 = vld [vmem:[#allocation5 + $0x650] sm:$0xff]
        %v539 = vld [vmem:[#allocation5 + $0x658] sm:$0xff]
        %v540 = vld [vmem:[#allocation5 + $0x660] sm:$0xff]
        %v541 = vld [vmem:[#allocation5 + $0x668] sm:$0xff]
        %v542 = vld [vmem:[#allocation5 + $0x670] sm:$0xff]
        %v543 = vld [vmem:[#allocation5 + $0x678] sm:$0xff]
        %v544 = vld [vmem:[#allocation5 + $0x680] sm:$0xff]
        %v545 = vld [vmem:[#allocation5 + $0x688] sm:$0xff]
        %v546 = vld [vmem:[#allocation5 + $0x690] sm:$0xff]
        %v547 = vld [vmem:[#allocation5 + $0x698] sm:$0xff]
        %v548 = vld [vmem:[#allocation5 + $0x6a0] sm:$0xff]
        %v549 = vld [vmem:[#allocation5 + $0x6a8] sm:$0xff]
        %v550 = vld [vmem:[#allocation5 + $0x6b0] sm:$0xff]
        %v551 = vld [vmem:[#allocation5 + $0x6b8] sm:$0xff]
        %v552 = vld [vmem:[#allocation5 + $0x6c0] sm:$0xff]
        %v553 = vld [vmem:[#allocation5 + $0x6c8] sm:$0xff]
        %v554 = vld [vmem:[#allocation5 + $0x6d0] sm:$0xff]
        %v555 = vld [vmem:[#allocation5 + $0x6d8] sm:$0xff]
        %v556 = vld [vmem:[#allocation5 + $0x6e0] sm:$0xff]
        %v557 = vld [vmem:[#allocation5 + $0x6e8] sm:$0xff]
        %v558 = vld [vmem:[#allocation5 + $0x6f0] sm:$0xff]
        %v559 = vld [vmem:[#allocation5 + $0x6f8] sm:$0xff]
        %v560 = vld [vmem:[#allocation5 + $0x700] sm:$0xff]
        %v561 = vld [vmem:[#allocation5 + $0x708] sm:$0xff]
        %v562 = vld [vmem:[#allocation5 + $0x710] sm:$0xff]
        %v563 = vld [vmem:[#allocation5 + $0x718] sm:$0xff]
        %v564 = vld [vmem:[#allocation5 + $0x720] sm:$0xff]
        %v565 = vld [vmem:[#allocation5 + $0x728] sm:$0xff]
        %v566 = vld [vmem:[#allocation5 + $0x730] sm:$0xff]
        %v567 = vld [vmem:[#allocation5 + $0x738] sm:$0xff]
        %v568 = vld [vmem:[#allocation5 + $0x740] sm:$0xff]
        %v569 = vld [vmem:[#allocation5 + $0x748] sm:$0xff]
        %v570 = vld [vmem:[#allocation5 + $0x750] sm:$0xff]
        %v571 = vld [vmem:[#allocation5 + $0x758] sm:$0xff]
        %v572 = vld [vmem:[#allocation5 + $0x760] sm:$0xff]
        %v573 = vld [vmem:[#allocation5 + $0x768] sm:$0xff]
        %v574 = vld [vmem:[#allocation5 + $0x770] sm:$0xff]
        %v575 = vld [vmem:[#allocation5 + $0x778] sm:$0xff]
        %v576 = vld [vmem:[#allocation5 + $0x780] sm:$0xff]
        %v577 = vld [vmem:[#allocation5 + $0x788] sm:$0xff]
        %v578 = vld [vmem:[#allocation5 + $0x790] sm:$0xff]
        %v579 = vld [vmem:[#allocation5 + $0x798] sm:$0xff]
        %v580 = vld [vmem:[#allocation5 + $0x7a0] sm:$0xff]
        %v581 = vld [vmem:[#allocation5 + $0x7a8] sm:$0xff]
        %v582 = vld [vmem:[#allocation5 + $0x7b0] sm:$0xff]
        %v583 = vld [vmem:[#allocation5 + $0x7b8] sm:$0xff]
        %v584 = vld [vmem:[#allocation5 + $0x7c0] sm:$0xff]
        %v585 = vld [vmem:[#allocation5 + $0x7c8] sm:$0xff]
        %v586 = vld [vmem:[#allocation5 + $0x7d0] sm:$0xff]
        %v587 = vld [vmem:[#allocation5 + $0x7d8] sm:$0xff]
        %v588 = vld [vmem:[#allocation5 + $0x7e0] sm:$0xff]
        %v589 = vld [vmem:[#allocation5 + $0x7e8] sm:$0xff]
        %v590 = vld [vmem:[#allocation5 + $0x7f0] sm:$0xff]
        %v591 = vld [vmem:[#allocation5 + $0x7f8] sm:$0xff]
        %v592 = vld [vmem:[#allocation7] sm:$0xff]
        %v594 = vperm.slane %v592, 0
        %v595 = vperm.slane %v592, 1
        %v596 = vperm.slane %v592, 2
        %v597 = vperm.slane %v592, 3
        %v598 = vperm.slane %v592, 4
        %v599 = vperm.slane %v592, 5
        %v600 = vperm.slane %v592, 6
        %v601 = vperm.slane %v592, 7
        %610 = vmatpush.msra.mxu0 %v456
        %611 = vmatpush.msra.mxu0 %v448
        %612 = vmatpush.msra.mxu0 %v440
        %613 = vmatpush.msra.mxu0 %v432
        %614 = vmatpush.msra.mxu0 %v424
        %615 = vmatpush.msra.mxu0 %v416
        %616 = vmatpush.msra.mxu0 %v408
        %617 = vmatpush.msra.mxu0 %v400
        %618 = vmatpush.msra.mxu0 %v392
        %619 = vmatpush.msra.mxu0 %v384
        %620 = vmatpush.msra.mxu0 %v376
        %621 = vmatpush.msra.mxu0 %v368
        %622 = vmatpush.msra.mxu0 %v360
        %623 = vmatpush.msra.mxu0 %v352
        %624 = vmatpush.msra.mxu0 %v344
        %625 = vmatpush.msra.mxu0 %v336
        %626 = vmatmul.f32.gmra.mxu0 %v334
        %v627 = vpop.f32.mrf.mxu0
        %v628 = vadd.f32 %v594, %v627
        %629 = vdwg.mxu0
        %630 = vmatpush.msra.mxu0 %v584
        %631 = vmatpush.msra.mxu0 %v576
        %632 = vmatpush.msra.mxu0 %v568
        %633 = vmatpush.msra.mxu0 %v560
        %634 = vmatpush.msra.mxu0 %v552
        %635 = vmatpush.msra.mxu0 %v544
        %636 = vmatpush.msra.mxu0 %v536
        %637 = vmatpush.msra.mxu0 %v528
        %638 = vmatpush.msra.mxu0 %v520
        %639 = vmatpush.msra.mxu0 %v512
        %640 = vmatpush.msra.mxu0 %v504
        %641 = vmatpush.msra.mxu0 %v496
        %642 = vmatpush.msra.mxu0 %v488
        %643 = vmatpush.msra.mxu0 %v480
        %644 = vmatpush.msra.mxu0 %v472
        %645 = vmatpush.msra.mxu0 %v464
        %646 = vmatmul.f32.gmra.mxu0 %v335
        %v647 = vpop.f32.mrf.mxu0
        %v648 = vadd.f32 %v628, %v647
        %649 = vdwg.mxu0
        %650 = vmatpush.msra.mxu0 %v457
        %651 = vmatpush.msra.mxu0 %v449
        %652 = vmatpush.msra.mxu0 %v441
        %653 = vmatpush.msra.mxu0 %v433
        %654 = vmatpush.msra.mxu0 %v425
        %655 = vmatpush.msra.mxu0 %v417
        %656 = vmatpush.msra.mxu0 %v409
        %657 = vmatpush.msra.mxu0 %v401
        %658 = vmatpush.msra.mxu0 %v393
        %659 = vmatpush.msra.mxu0 %v385
        %660 = vmatpush.msra.mxu0 %v377
        %661 = vmatpush.msra.mxu0 %v369
        %662 = vmatpush.msra.mxu0 %v361
        %663 = vmatpush.msra.mxu0 %v353
        %664 = vmatpush.msra.mxu0 %v345
        %665 = vmatpush.msra.mxu0 %v337
        %666 = vmatmul.f32.gmra.mxu0 %v334
        %v667 = vpop.f32.mrf.mxu0
        %v668 = vadd.f32 %v595, %v667
        %669 = vdwg.mxu0
        %670 = vmatpush.msra.mxu0 %v585
        %671 = vmatpush.msra.mxu0 %v577
        %672 = vmatpush.msra.mxu0 %v569
        %673 = vmatpush.msra.mxu0 %v561
        %674 = vmatpush.msra.mxu0 %v553
        %675 = vmatpush.msra.mxu0 %v545
        %676 = vmatpush.msra.mxu0 %v537
        %677 = vmatpush.msra.mxu0 %v529
        %678 = vmatpush.msra.mxu0 %v521
        %679 = vmatpush.msra.mxu0 %v513
        %680 = vmatpush.msra.mxu0 %v505
        %681 = vmatpush.msra.mxu0 %v497
        %682 = vmatpush.msra.mxu0 %v489
        %683 = vmatpush.msra.mxu0 %v481
        %684 = vmatpush.msra.mxu0 %v473
        %685 = vmatpush.msra.mxu0 %v465
        %686 = vmatmul.f32.gmra.mxu0 %v335
        %v687 = vpop.f32.mrf.mxu0
        %v688 = vadd.f32 %v668, %v687
        %689 = vdwg.mxu0
        %690 = vmatpush.msra.mxu0 %v458
        %691 = vmatpush.msra.mxu0 %v450
        %692 = vmatpush.msra.mxu0 %v442
        %693 = vmatpush.msra.mxu0 %v434
        %694 = vmatpush.msra.mxu0 %v426
        %695 = vmatpush.msra.mxu0 %v418
        %696 = vmatpush.msra.mxu0 %v410
        %697 = vmatpush.msra.mxu0 %v402
        %698 = vmatpush.msra.mxu0 %v394
        %699 = vmatpush.msra.mxu0 %v386
        %700 = vmatpush.msra.mxu0 %v378
        %701 = vmatpush.msra.mxu0 %v370
        %702 = vmatpush.msra.mxu0 %v362
        %703 = vmatpush.msra.mxu0 %v354
        %704 = vmatpush.msra.mxu0 %v346
        %705 = vmatpush.msra.mxu0 %v338
        %706 = vmatmul.f32.gmra.mxu0 %v334
        %v707 = vpop.f32.mrf.mxu0
        %v708 = vadd.f32 %v596, %v707
        %709 = vdwg.mxu0
        %710 = vmatpush.msra.mxu0 %v586
        %711 = vmatpush.msra.mxu0 %v578
        %712 = vmatpush.msra.mxu0 %v570
        %713 = vmatpush.msra.mxu0 %v562
        %714 = vmatpush.msra.mxu0 %v554
        %715 = vmatpush.msra.mxu0 %v546
        %716 = vmatpush.msra.mxu0 %v538
        %717 = vmatpush.msra.mxu0 %v530
        %718 = vmatpush.msra.mxu0 %v522
        %719 = vmatpush.msra.mxu0 %v514
        %720 = vmatpush.msra.mxu0 %v506
        %721 = vmatpush.msra.mxu0 %v498
        %722 = vmatpush.msra.mxu0 %v490
        %723 = vmatpush.msra.mxu0 %v482
        %724 = vmatpush.msra.mxu0 %v474
        %725 = vmatpush.msra.mxu0 %v466
        %726 = vmatmul.f32.gmra.mxu0 %v335
        %v727 = vpop.f32.mrf.mxu0
        %v728 = vadd.f32 %v708, %v727
        %729 = vdwg.mxu0
        %730 = vmatpush.msra.mxu0 %v459
        %731 = vmatpush.msra.mxu0 %v451
        %732 = vmatpush.msra.mxu0 %v443
        %733 = vmatpush.msra.mxu0 %v435
        %734 = vmatpush.msra.mxu0 %v427
        %735 = vmatpush.msra.mxu0 %v419
        %736 = vmatpush.msra.mxu0 %v411
        %737 = vmatpush.msra.mxu0 %v403
        %738 = vmatpush.msra.mxu0 %v395
        %739 = vmatpush.msra.mxu0 %v387
        %740 = vmatpush.msra.mxu0 %v379
        %741 = vmatpush.msra.mxu0 %v371
        %742 = vmatpush.msra.mxu0 %v363
        %743 = vmatpush.msra.mxu0 %v355
        %744 = vmatpush.msra.mxu0 %v347
        %745 = vmatpush.msra.mxu0 %v339
        %746 = vmatmul.f32.gmra.mxu0 %v334
        %v747 = vpop.f32.mrf.mxu0
        %v748 = vadd.f32 %v597, %v747
        %749 = vdwg.mxu0
        %750 = vmatpush.msra.mxu0 %v587
        %751 = vmatpush.msra.mxu0 %v579
        %752 = vmatpush.msra.mxu0 %v571
        %753 = vmatpush.msra.mxu0 %v563
        %754 = vmatpush.msra.mxu0 %v555
        %755 = vmatpush.msra.mxu0 %v547
        %756 = vmatpush.msra.mxu0 %v539
        %757 = vmatpush.msra.mxu0 %v531
        %758 = vmatpush.msra.mxu0 %v523
        %759 = vmatpush.msra.mxu0 %v515
        %760 = vmatpush.msra.mxu0 %v507
        %761 = vmatpush.msra.mxu0 %v499
        %762 = vmatpush.msra.mxu0 %v491
        %763 = vmatpush.msra.mxu0 %v483
        %764 = vmatpush.msra.mxu0 %v475
        %765 = vmatpush.msra.mxu0 %v467
        %766 = vmatmul.f32.gmra.mxu0 %v335
        %v767 = vpop.f32.mrf.mxu0
        %v768 = vadd.f32 %v748, %v767
        %769 = vdwg.mxu0
        %770 = vmatpush.msra.mxu0 %v460
        %771 = vmatpush.msra.mxu0 %v452
        %772 = vmatpush.msra.mxu0 %v444
        %773 = vmatpush.msra.mxu0 %v436
        %774 = vmatpush.msra.mxu0 %v428
        %775 = vmatpush.msra.mxu0 %v420
        %776 = vmatpush.msra.mxu0 %v412
        %777 = vmatpush.msra.mxu0 %v404
        %778 = vmatpush.msra.mxu0 %v396
        %779 = vmatpush.msra.mxu0 %v388
        %780 = vmatpush.msra.mxu0 %v380
        %781 = vmatpush.msra.mxu0 %v372
        %782 = vmatpush.msra.mxu0 %v364
        %783 = vmatpush.msra.mxu0 %v356
        %784 = vmatpush.msra.mxu0 %v348
        %785 = vmatpush.msra.mxu0 %v340
        %786 = vmatmul.f32.gmra.mxu0 %v334
        %v787 = vpop.f32.mrf.mxu0
        %v788 = vadd.f32 %v598, %v787
        %789 = vdwg.mxu0
        %790 = vmatpush.msra.mxu0 %v588
        %791 = vmatpush.msra.mxu0 %v580
        %792 = vmatpush.msra.mxu0 %v572
        %793 = vmatpush.msra.mxu0 %v564
        %794 = vmatpush.msra.mxu0 %v556
        %795 = vmatpush.msra.mxu0 %v548
        %796 = vmatpush.msra.mxu0 %v540
        %797 = vmatpush.msra.mxu0 %v532
        %798 = vmatpush.msra.mxu0 %v524
        %799 = vmatpush.msra.mxu0 %v516
        %800 = vmatpush.msra.mxu0 %v508
        %801 = vmatpush.msra.mxu0 %v500
        %802 = vmatpush.msra.mxu0 %v492
        %803 = vmatpush.msra.mxu0 %v484
        %804 = vmatpush.msra.mxu0 %v476
        %805 = vmatpush.msra.mxu0 %v468
        %806 = vmatmul.f32.gmra.mxu0 %v335
        %v807 = vpop.f32.mrf.mxu0
        %v808 = vadd.f32 %v788, %v807
        %809 = vdwg.mxu0
        %810 = vmatpush.msra.mxu0 %v461
        %811 = vmatpush.msra.mxu0 %v453
        %812 = vmatpush.msra.mxu0 %v445
        %813 = vmatpush.msra.mxu0 %v437
        %814 = vmatpush.msra.mxu0 %v429
        %815 = vmatpush.msra.mxu0 %v421
        %816 = vmatpush.msra.mxu0 %v413
        %817 = vmatpush.msra.mxu0 %v405
        %818 = vmatpush.msra.mxu0 %v397
        %819 = vmatpush.msra.mxu0 %v389
        %820 = vmatpush.msra.mxu0 %v381
        %821 = vmatpush.msra.mxu0 %v373
        %822 = vmatpush.msra.mxu0 %v365
        %823 = vmatpush.msra.mxu0 %v357
        %824 = vmatpush.msra.mxu0 %v349
        %825 = vmatpush.msra.mxu0 %v341
        %826 = vmatmul.f32.gmra.mxu0 %v334
        %v827 = vpop.f32.mrf.mxu0
        %v828 = vadd.f32 %v599, %v827
        %829 = vdwg.mxu0
        %830 = vmatpush.msra.mxu0 %v589
        %831 = vmatpush.msra.mxu0 %v581
        %832 = vmatpush.msra.mxu0 %v573
        %833 = vmatpush.msra.mxu0 %v565
        %834 = vmatpush.msra.mxu0 %v557
        %835 = vmatpush.msra.mxu0 %v549
        %836 = vmatpush.msra.mxu0 %v541
        %837 = vmatpush.msra.mxu0 %v533
        %838 = vmatpush.msra.mxu0 %v525
        %839 = vmatpush.msra.mxu0 %v517
        %840 = vmatpush.msra.mxu0 %v509
        %841 = vmatpush.msra.mxu0 %v501
        %842 = vmatpush.msra.mxu0 %v493
        %843 = vmatpush.msra.mxu0 %v485
        %844 = vmatpush.msra.mxu0 %v477
        %845 = vmatpush.msra.mxu0 %v469
        %846 = vmatmul.f32.gmra.mxu0 %v335
        %v847 = vpop.f32.mrf.mxu0
        %v848 = vadd.f32 %v828, %v847
        %849 = vdwg.mxu0
        %850 = vmatpush.msra.mxu0 %v462
        %851 = vmatpush.msra.mxu0 %v454
        %852 = vmatpush.msra.mxu0 %v446
        %853 = vmatpush.msra.mxu0 %v438
        %854 = vmatpush.msra.mxu0 %v430
        %855 = vmatpush.msra.mxu0 %v422
        %856 = vmatpush.msra.mxu0 %v414
        %857 = vmatpush.msra.mxu0 %v406
        %858 = vmatpush.msra.mxu0 %v398
        %859 = vmatpush.msra.mxu0 %v390
        %860 = vmatpush.msra.mxu0 %v382
        %861 = vmatpush.msra.mxu0 %v374
        %862 = vmatpush.msra.mxu0 %v366
        %863 = vmatpush.msra.mxu0 %v358
        %864 = vmatpush.msra.mxu0 %v350
        %865 = vmatpush.msra.mxu0 %v342
        %866 = vmatmul.f32.gmra.mxu0 %v334
        %v867 = vpop.f32.mrf.mxu0
        %v868 = vadd.f32 %v600, %v867
        %869 = vdwg.mxu0
        %870 = vmatpush.msra.mxu0 %v590
        %871 = vmatpush.msra.mxu0 %v582
        %872 = vmatpush.msra.mxu0 %v574
        %873 = vmatpush.msra.mxu0 %v566
        %874 = vmatpush.msra.mxu0 %v558
        %875 = vmatpush.msra.mxu0 %v550
        %876 = vmatpush.msra.mxu0 %v542
        %877 = vmatpush.msra.mxu0 %v534
        %878 = vmatpush.msra.mxu0 %v526
        %879 = vmatpush.msra.mxu0 %v518
        %880 = vmatpush.msra.mxu0 %v510
        %881 = vmatpush.msra.mxu0 %v502
        %882 = vmatpush.msra.mxu0 %v494
        %883 = vmatpush.msra.mxu0 %v486
        %884 = vmatpush.msra.mxu0 %v478
        %885 = vmatpush.msra.mxu0 %v470
        %886 = vmatmul.f32.gmra.mxu0 %v335
        %v887 = vpop.f32.mrf.mxu0
        %v888 = vadd.f32 %v868, %v887
        %889 = vdwg.mxu0
        %890 = vmatpush.msra.mxu0 %v463
        %891 = vmatpush.msra.mxu0 %v455
        %892 = vmatpush.msra.mxu0 %v447
        %893 = vmatpush.msra.mxu0 %v439
        %894 = vmatpush.msra.mxu0 %v431
        %895 = vmatpush.msra.mxu0 %v423
        %896 = vmatpush.msra.mxu0 %v415
        %897 = vmatpush.msra.mxu0 %v407
        %898 = vmatpush.msra.mxu0 %v399
        %899 = vmatpush.msra.mxu0 %v391
        %900 = vmatpush.msra.mxu0 %v383
        %901 = vmatpush.msra.mxu0 %v375
        %902 = vmatpush.msra.mxu0 %v367
        %903 = vmatpush.msra.mxu0 %v359
        %904 = vmatpush.msra.mxu0 %v351
        %905 = vmatpush.msra.mxu0 %v343
        %906 = vmatmul.f32.gmra.mxu0 %v334
        %v907 = vpop.f32.mrf.mxu0
        %v908 = vadd.f32 %v601, %v907
        %909 = vdwg.mxu0
        %910 = vmatpush.msra.mxu0 %v591
        %911 = vmatpush.msra.mxu0 %v583
        %912 = vmatpush.msra.mxu0 %v575
        %913 = vmatpush.msra.mxu0 %v567
        %914 = vmatpush.msra.mxu0 %v559
        %915 = vmatpush.msra.mxu0 %v551
        %916 = vmatpush.msra.mxu0 %v543
        %917 = vmatpush.msra.mxu0 %v535
        %918 = vmatpush.msra.mxu0 %v527
        %919 = vmatpush.msra.mxu0 %v519
        %920 = vmatpush.msra.mxu0 %v511
        %921 = vmatpush.msra.mxu0 %v503
        %922 = vmatpush.msra.mxu0 %v495
        %923 = vmatpush.msra.mxu0 %v487
        %924 = vmatpush.msra.mxu0 %v479
        %925 = vmatpush.msra.mxu0 %v471
        %926 = vmatmul.f32.gmra.mxu0 %v335
        %v927 = vpop.f32.mrf.mxu0
        %v928 = vadd.f32 %v908, %v927
        %929 = vdwg.mxu0
        %v930 = vld [vmem:[#allocation8] sm:$0xff]
        %v931 = vld [vmem:[#allocation8 + $0x8] sm:$0xff]
        %v932 = vld [vmem:[#allocation8 + $0x10] sm:$0xff]
        %v933 = vld [vmem:[#allocation8 + $0x18] sm:$0xff]
        %v934 = vld [vmem:[#allocation10] sm:$0xff]
        %v935 = vld [vmem:[#allocation10 + $0x8] sm:$0xff]
        %v936 = vld [vmem:[#allocation10 + $0x10] sm:$0xff]
        %v937 = vld [vmem:[#allocation10 + $0x18] sm:$0xff]
        %v938 = vld [vmem:[#allocation10 + $0x20] sm:$0xff]
        %v939 = vld [vmem:[#allocation10 + $0x28] sm:$0xff]
        %v940 = vld [vmem:[#allocation10 + $0x30] sm:$0xff]
        %v941 = vld [vmem:[#allocation10 + $0x38] sm:$0xff]
        %v942 = vld [vmem:[#allocation10 + $0x40] sm:$0xff]
        %v943 = vld [vmem:[#allocation10 + $0x48] sm:$0xff]
        %v944 = vld [vmem:[#allocation10 + $0x50] sm:$0xff]
        %v945 = vld [vmem:[#allocation10 + $0x58] sm:$0xff]
        %v946 = vld [vmem:[#allocation10 + $0x60] sm:$0xff]
        %v947 = vld [vmem:[#allocation10 + $0x68] sm:$0xff]
        %v948 = vld [vmem:[#allocation10 + $0x70] sm:$0xff]
        %v949 = vld [vmem:[#allocation10 + $0x78] sm:$0xff]
        %v950 = vld [vmem:[#allocation10 + $0x80] sm:$0xff]
        %v951 = vld [vmem:[#allocation10 + $0x88] sm:$0xff]
        %v952 = vld [vmem:[#allocation10 + $0x90] sm:$0xff]
        %v953 = vld [vmem:[#allocation10 + $0x98] sm:$0xff]
        %v954 = vld [vmem:[#allocation10 + $0xa0] sm:$0xff]
        %v955 = vld [vmem:[#allocation10 + $0xa8] sm:$0xff]
        %v956 = vld [vmem:[#allocation10 + $0xb0] sm:$0xff]
        %v957 = vld [vmem:[#allocation10 + $0xb8] sm:$0xff]
        %v958 = vld [vmem:[#allocation10 + $0xc0] sm:$0xff]
        %v959 = vld [vmem:[#allocation10 + $0xc8] sm:$0xff]
        %v960 = vld [vmem:[#allocation10 + $0xd0] sm:$0xff]
        %v961 = vld [vmem:[#allocation10 + $0xd8] sm:$0xff]
        %v962 = vld [vmem:[#allocation10 + $0xe0] sm:$0xff]
        %v963 = vld [vmem:[#allocation10 + $0xe8] sm:$0xff]
        %v964 = vld [vmem:[#allocation10 + $0xf0] sm:$0xff]
        %v965 = vld [vmem:[#allocation10 + $0xf8] sm:$0xff]
        %vm966 = vcmask 261120
        %v968 = vsel %vm966, 0.0, 0
        %970 = vmatpush.msra.mxu0 0.0
        %971 = vmatpush.msra.mxu0 0.0
        %972 = vmatpush.msra.mxu0 0.0
        %973 = vmatpush.msra.mxu0 0.0
        %974 = vmatpush.msra.mxu0 0.0
        %975 = vmatpush.msra.mxu0 0.0
        %976 = vmatpush.msra.mxu0 0.0
        %977 = vmatpush.msra.mxu0 0.0
        %978 = vmatpush.msra.mxu0 0.0
        %979 = vmatpush.msra.mxu0 0.0
        %980 = vmatpush.msra.mxu0 0.0
        %981 = vmatpush.msra.mxu0 0.0
        %982 = vmatpush.msra.mxu0 %v933
        %983 = vmatpush.msra.mxu0 %v932
        %984 = vmatpush.msra.mxu0 %v931
        %985 = vmatpush.msra.mxu0 %v930
        %986 = vmatmul.f32.gmra.mxu0 %v968
        %v987 = vpop.f32.mrf.mxu0
        %v988 = vadd.f32 0.0, %v987
        %989 = vdwg.mxu0
        %v990 = vadd.f32 %v648, %v988
        %v991 = vxor.u32 %v990, 2147483648
        %v992 = vmul.f32 %v991, 1.442695
        %v993 = vpow.pop %v992
        %v994 = vadd.f32 %v993, 1.0
        %v995 = vrcp.pop %v994
        %v996 = vmul.f32 %v994, %v995
        %v997 = vsub.f32 1.0, %v996
        %v998 = vmul.f32 %v995, %v997
        %v999 = vadd.f32 %v995, %v998
        %vm1000 = vweird.f32 %v994
        %vm1001 = vweird.f32 %v995
        %vm1002 = vmor %vm1000, %vm1001
        %v1003 = vsel %vm1002, %v995, %v999
        %v1004 = vand.u32 2147483647, %v994
        %vm1005 = vcmp.eq.f32.partialorder %v1004, 8.507059e+37
        %v1006 = vand.u32 %v994, 2147483648
        %v1007 = vor.u32 1.1754944e-38, %v1006
        %v1008 = vsel %vm1005, %v1007, %v1003
        %v1009 = vmul.f32 1.0, %v1008
        %v1010 = vtanh.pop %v990
        %v1011 = vmul.f32 %v1009, 0.0
        %1013 = vrot.lane.b32.xlu0 %v1010, 32
        %v1014 = vpop.permute.xlu0 %1013
        %v1016 = vmul.f32 %v1009, %v1014
        %1018 = vrot.lane.b32.xlu0 %v1016, 32
        %v1019 = vpop.permute.xlu0 %1018
        %v1021 = vadd.f32 %v1011, %v1019
        %v1022 = vtanh.pop %v1021
        %1024 = vrot.lane.b32.xlu0 %v1022, 32
        %v1025 = vpop.permute.xlu0 %1024
        %v1027 = vmul.f32 %v1009, %v1025
        %1029 = vrot.lane.b32.xlu0 %v1027, 64
        %v1030 = vpop.permute.xlu0 %1029
        %v1031 = vsel %vm966, %v1030, 0
        %1033 = vmatpush.msra.mxu0 0.0
        %1034 = vmatpush.msra.mxu0 0.0
        %1035 = vmatpush.msra.mxu0 0.0
        %1036 = vmatpush.msra.mxu0 0.0
        %1037 = vmatpush.msra.mxu0 0.0
        %1038 = vmatpush.msra.mxu0 0.0
        %1039 = vmatpush.msra.mxu0 0.0
        %1040 = vmatpush.msra.mxu0 0.0
        %1041 = vmatpush.msra.mxu0 0.0
        %1042 = vmatpush.msra.mxu0 0.0
        %1043 = vmatpush.msra.mxu0 0.0
        %1044 = vmatpush.msra.mxu0 0.0
        %1045 = vmatpush.msra.mxu0 %v933
        %1046 = vmatpush.msra.mxu0 %v932
        %1047 = vmatpush.msra.mxu0 %v931
        %1048 = vmatpush.msra.mxu0 %v930
        %1049 = vmatmul.f32.gmra.mxu0 %v1031
        %v1050 = vpop.f32.mrf.mxu0
        %v1051 = vadd.f32 0.0, %v1050
        %1052 = vdwg.mxu0
        %v1053 = vadd.f32 %v688, %v1051
        %v1054 = vxor.u32 %v1053, 2147483648
        %v1055 = vmul.f32 %v1054, 1.442695
        %v1056 = vpow.pop %v1055
        %v1057 = vadd.f32 %v1056, 1.0
        %v1058 = vrcp.pop %v1057
        %v1059 = vmul.f32 %v1057, %v1058
        %v1060 = vsub.f32 1.0, %v1059
        %v1061 = vmul.f32 %v1058, %v1060
        %v1062 = vadd.f32 %v1058, %v1061
        %vm1063 = vweird.f32 %v1057
        %vm1064 = vweird.f32 %v1058
        %vm1065 = vmor %vm1063, %vm1064
        %v1066 = vsel %vm1065, %v1058, %v1062
        %v1067 = vand.u32 2147483647, %v1057
        %vm1068 = vcmp.eq.f32.partialorder %v1067, 8.507059e+37
        %v1069 = vand.u32 %v1057, 2147483648
        %v1070 = vor.u32 1.1754944e-38, %v1069
        %v1071 = vsel %vm1068, %v1070, %v1066
        %v1072 = vmul.f32 1.0, %v1071
        %v1073 = vtanh.pop %v1053
        %v1074 = vmul.f32 %v1072, %v1021
        %1076 = vrot.lane.b32.xlu0 %v1073, 32
        %v1077 = vpop.permute.xlu0 %1076
        %v1079 = vmul.f32 %v1072, %v1077
        %1081 = vrot.lane.b32.xlu0 %v1079, 32
        %v1082 = vpop.permute.xlu0 %1081
        %v1084 = vadd.f32 %v1074, %v1082
        %v1085 = vtanh.pop %v1084
        %1087 = vrot.lane.b32.xlu0 %v1085, 32
        %v1088 = vpop.permute.xlu0 %1087
        %v1090 = vmul.f32 %v1072, %v1088
        %1092 = vrot.lane.b32.xlu0 %v1090, 64
        %v1093 = vpop.permute.xlu0 %1092
        %v1094 = vsel %vm966, %v1093, 0
        %1096 = vmatpush.msra.mxu0 0.0
        %1097 = vmatpush.msra.mxu0 0.0
        %1098 = vmatpush.msra.mxu0 0.0
        %1099 = vmatpush.msra.mxu0 0.0
        %1100 = vmatpush.msra.mxu0 0.0
        %1101 = vmatpush.msra.mxu0 0.0
        %1102 = vmatpush.msra.mxu0 0.0
        %1103 = vmatpush.msra.mxu0 0.0
        %1104 = vmatpush.msra.mxu0 0.0
        %1105 = vmatpush.msra.mxu0 0.0
        %1106 = vmatpush.msra.mxu0 0.0
        %1107 = vmatpush.msra.mxu0 0.0
        %1108 = vmatpush.msra.mxu0 %v941
        %1109 = vmatpush.msra.mxu0 %v940
        %1110 = vmatpush.msra.mxu0 %v939
        %1111 = vmatpush.msra.mxu0 %v938
        %1112 = vmatmul.f32.gmra.mxu0 %v1094
        %v1113 = vpop.f32.mrf.mxu0
        %v1114 = vadd.f32 0.0, %v1113
        %1115 = vdwg.mxu0
        %1116 = vmatpush.msra.mxu0 0.0
        %1117 = vmatpush.msra.mxu0 0.0
        %1118 = vmatpush.msra.mxu0 0.0
        %1119 = vmatpush.msra.mxu0 0.0
        %1120 = vmatpush.msra.mxu0 0.0
        %1121 = vmatpush.msra.mxu0 0.0
        %1122 = vmatpush.msra.mxu0 0.0
        %1123 = vmatpush.msra.mxu0 0.0
        %1124 = vmatpush.msra.mxu0 0.0
        %1125 = vmatpush.msra.mxu0 0.0
        %1126 = vmatpush.msra.mxu0 0.0
        %1127 = vmatpush.msra.mxu0 0.0
        %1128 = vmatpush.msra.mxu0 %v937
        %1129 = vmatpush.msra.mxu0 %v936
        %1130 = vmatpush.msra.mxu0 %v935
        %1131 = vmatpush.msra.mxu0 %v934
        %1132 = vmatmul.f32.gmra.mxu0 %v1031
        %v1133 = vpop.f32.mrf.mxu0
        %v1134 = vadd.f32 %v1114, %v1133
        %1135 = vdwg.mxu0
        %1136 = vmatpush.msra.mxu0 0.0
        %1137 = vmatpush.msra.mxu0 0.0
        %1138 = vmatpush.msra.mxu0 0.0
        %1139 = vmatpush.msra.mxu0 0.0
        %1140 = vmatpush.msra.mxu0 0.0
        %1141 = vmatpush.msra.mxu0 0.0
        %1142 = vmatpush.msra.mxu0 0.0
        %1143 = vmatpush.msra.mxu0 0.0
        %1144 = vmatpush.msra.mxu0 0.0
        %1145 = vmatpush.msra.mxu0 0.0
        %1146 = vmatpush.msra.mxu0 0.0
        %1147 = vmatpush.msra.mxu0 0.0
        %1148 = vmatpush.msra.mxu0 %v933
        %1149 = vmatpush.msra.mxu0 %v932
        %1150 = vmatpush.msra.mxu0 %v931
        %1151 = vmatpush.msra.mxu0 %v930
        %1152 = vmatmul.f32.gmra.mxu0 %v1094
        %v1153 = vpop.f32.mrf.mxu0
        %v1154 = vadd.f32 0.0, %v1153
        %1155 = vdwg.mxu0
        %v1156 = vadd.f32 %v728, %v1154
        %v1157 = vxor.u32 %v1156, 2147483648
        %v1158 = vmul.f32 %v1157, 1.442695
        %v1159 = vpow.pop %v1158
        %v1160 = vadd.f32 %v1159, 1.0
        %v1161 = vrcp.pop %v1160
        %v1162 = vmul.f32 %v1160, %v1161
        %v1163 = vsub.f32 1.0, %v1162
        %v1164 = vmul.f32 %v1161, %v1163
        %v1165 = vadd.f32 %v1161, %v1164
        %vm1166 = vweird.f32 %v1160
        %vm1167 = vweird.f32 %v1161
        %vm1168 = vmor %vm1166, %vm1167
        %v1169 = vsel %vm1168, %v1161, %v1165
        %v1170 = vand.u32 2147483647, %v1160
        %vm1171 = vcmp.eq.f32.partialorder %v1170, 8.507059e+37
        %v1172 = vand.u32 %v1160, 2147483648
        %v1173 = vor.u32 1.1754944e-38, %v1172
        %v1174 = vsel %vm1171, %v1173, %v1169
        %v1175 = vmul.f32 1.0, %v1174
        %v1176 = vtanh.pop %v1156
        %v1177 = vmul.f32 %v1175, %v1084
        %1179 = vrot.lane.b32.xlu0 %v1176, 32
        %v1180 = vpop.permute.xlu0 %1179
        %v1182 = vmul.f32 %v1175, %v1180
        %1184 = vrot.lane.b32.xlu0 %v1182, 32
        %v1185 = vpop.permute.xlu0 %1184
        %v1187 = vadd.f32 %v1177, %v1185
        %v1188 = vtanh.pop %v1187
        %1190 = vrot.lane.b32.xlu0 %v1188, 32
        %v1191 = vpop.permute.xlu0 %1190
        %v1193 = vmul.f32 %v1175, %v1191
        %1195 = vrot.lane.b32.xlu0 %v1193, 64
        %v1196 = vpop.permute.xlu0 %1195
        %v1197 = vsel %vm966, %v1196, 0
        %1199 = vmatpush.msra.mxu0 0.0
        %1200 = vmatpush.msra.mxu0 0.0
        %1201 = vmatpush.msra.mxu0 0.0
        %1202 = vmatpush.msra.mxu0 0.0
        %1203 = vmatpush.msra.mxu0 0.0
        %1204 = vmatpush.msra.mxu0 0.0
        %1205 = vmatpush.msra.mxu0 0.0
        %1206 = vmatpush.msra.mxu0 0.0
        %1207 = vmatpush.msra.mxu0 0.0
        %1208 = vmatpush.msra.mxu0 0.0
        %1209 = vmatpush.msra.mxu0 0.0
        %1210 = vmatpush.msra.mxu0 0.0
        %1211 = vmatpush.msra.mxu0 %v945
        %1212 = vmatpush.msra.mxu0 %v944
        %1213 = vmatpush.msra.mxu0 %v943
        %1214 = vmatpush.msra.mxu0 %v942
        %1215 = vmatmul.f32.gmra.mxu0 %v1197
        %v1216 = vpop.f32.mrf.mxu0
        %v1217 = vadd.f32 0.0, %v1216
        %1218 = vdwg.mxu0
        %v1219 = vadd.f32 %v1134, %v1217
        %1220 = vmatpush.msra.mxu0 0.0
        %1221 = vmatpush.msra.mxu0 0.0
        %1222 = vmatpush.msra.mxu0 0.0
        %1223 = vmatpush.msra.mxu0 0.0
        %1224 = vmatpush.msra.mxu0 0.0
        %1225 = vmatpush.msra.mxu0 0.0
        %1226 = vmatpush.msra.mxu0 0.0
        %1227 = vmatpush.msra.mxu0 0.0
        %1228 = vmatpush.msra.mxu0 0.0
        %1229 = vmatpush.msra.mxu0 0.0
        %1230 = vmatpush.msra.mxu0 0.0
        %1231 = vmatpush.msra.mxu0 0.0
        %1232 = vmatpush.msra.mxu0 %v933
        %1233 = vmatpush.msra.mxu0 %v932
        %1234 = vmatpush.msra.mxu0 %v931
        %1235 = vmatpush.msra.mxu0 %v930
        %1236 = vmatmul.f32.gmra.mxu0 %v1197
        %v1237 = vpop.f32.mrf.mxu0
        %v1238 = vadd.f32 0.0, %v1237
        %1239 = vdwg.mxu0
        %v1240 = vadd.f32 %v768, %v1238
        %v1241 = vxor.u32 %v1240, 2147483648
        %v1242 = vmul.f32 %v1241, 1.442695
        %v1243 = vpow.pop %v1242
        %v1244 = vadd.f32 %v1243, 1.0
        %v1245 = vrcp.pop %v1244
        %v1246 = vmul.f32 %v1244, %v1245
        %v1247 = vsub.f32 1.0, %v1246
        %v1248 = vmul.f32 %v1245, %v1247
        %v1249 = vadd.f32 %v1245, %v1248
        %vm1250 = vweird.f32 %v1244
        %vm1251 = vweird.f32 %v1245
        %vm1252 = vmor %vm1250, %vm1251
        %v1253 = vsel %vm1252, %v1245, %v1249
        %v1254 = vand.u32 2147483647, %v1244
        %vm1255 = vcmp.eq.f32.partialorder %v1254, 8.507059e+37
        %v1256 = vand.u32 %v1244, 2147483648
        %v1257 = vor.u32 1.1754944e-38, %v1256
        %v1258 = vsel %vm1255, %v1257, %v1253
        %v1259 = vmul.f32 1.0, %v1258
        %v1260 = vtanh.pop %v1240
        %v1261 = vmul.f32 %v1259, %v1187
        %1263 = vrot.lane.b32.xlu0 %v1260, 32
        %v1264 = vpop.permute.xlu0 %1263
        %v1266 = vmul.f32 %v1259, %v1264
        %1268 = vrot.lane.b32.xlu0 %v1266, 32
        %v1269 = vpop.permute.xlu0 %1268
        %v1271 = vadd.f32 %v1261, %v1269
        %v1272 = vtanh.pop %v1271
        %1274 = vrot.lane.b32.xlu0 %v1272, 32
        %v1275 = vpop.permute.xlu0 %1274
        %v1277 = vmul.f32 %v1259, %v1275
        %1279 = vrot.lane.b32.xlu0 %v1277, 64
        %v1280 = vpop.permute.xlu0 %1279
        %v1281 = vsel %vm966, %v1280, 0
        %1283 = vmatpush.msra.mxu0 0.0
        %1284 = vmatpush.msra.mxu0 0.0
        %1285 = vmatpush.msra.mxu0 0.0
        %1286 = vmatpush.msra.mxu0 0.0
        %1287 = vmatpush.msra.mxu0 0.0
        %1288 = vmatpush.msra.mxu0 0.0
        %1289 = vmatpush.msra.mxu0 0.0
        %1290 = vmatpush.msra.mxu0 0.0
        %1291 = vmatpush.msra.mxu0 0.0
        %1292 = vmatpush.msra.mxu0 0.0
        %1293 = vmatpush.msra.mxu0 0.0
        %1294 = vmatpush.msra.mxu0 0.0
        %1295 = vmatpush.msra.mxu0 %v949
        %1296 = vmatpush.msra.mxu0 %v948
        %1297 = vmatpush.msra.mxu0 %v947
        %1298 = vmatpush.msra.mxu0 %v946
        %1299 = vmatmul.f32.gmra.mxu0 %v1281
        %v1300 = vpop.f32.mrf.mxu0
        %v1301 = vadd.f32 0.0, %v1300
        %1302 = vdwg.mxu0
        %v1303 = vadd.f32 %v1219, %v1301
        %1304 = vmatpush.msra.mxu0 0.0
        %1305 = vmatpush.msra.mxu0 0.0
        %1306 = vmatpush.msra.mxu0 0.0
        %1307 = vmatpush.msra.mxu0 0.0
        %1308 = vmatpush.msra.mxu0 0.0
        %1309 = vmatpush.msra.mxu0 0.0
        %1310 = vmatpush.msra.mxu0 0.0
        %1311 = vmatpush.msra.mxu0 0.0
        %1312 = vmatpush.msra.mxu0 0.0
        %1313 = vmatpush.msra.mxu0 0.0
        %1314 = vmatpush.msra.mxu0 0.0
        %1315 = vmatpush.msra.mxu0 0.0
        %1316 = vmatpush.msra.mxu0 %v933
        %1317 = vmatpush.msra.mxu0 %v932
        %1318 = vmatpush.msra.mxu0 %v931
        %1319 = vmatpush.msra.mxu0 %v930
        %1320 = vmatmul.f32.gmra.mxu0 %v1281
        %v1321 = vpop.f32.mrf.mxu0
        %v1322 = vadd.f32 0.0, %v1321
        %1323 = vdwg.mxu0
        %v1324 = vadd.f32 %v808, %v1322
        %v1325 = vxor.u32 %v1324, 2147483648
        %v1326 = vmul.f32 %v1325, 1.442695
        %v1327 = vpow.pop %v1326
        %v1328 = vadd.f32 %v1327, 1.0
        %v1329 = vrcp.pop %v1328
        %v1330 = vmul.f32 %v1328, %v1329
        %v1331 = vsub.f32 1.0, %v1330
        %v1332 = vmul.f32 %v1329, %v1331
        %v1333 = vadd.f32 %v1329, %v1332
        %vm1334 = vweird.f32 %v1328
        %vm1335 = vweird.f32 %v1329
        %vm1336 = vmor %vm1334, %vm1335
        %v1337 = vsel %vm1336, %v1329, %v1333
        %v1338 = vand.u32 2147483647, %v1328
        %vm1339 = vcmp.eq.f32.partialorder %v1338, 8.507059e+37
        %v1340 = vand.u32 %v1328, 2147483648
        %v1341 = vor.u32 1.1754944e-38, %v1340
        %v1342 = vsel %vm1339, %v1341, %v1337
        %v1343 = vmul.f32 1.0, %v1342
        %v1344 = vtanh.pop %v1324
        %v1345 = vmul.f32 %v1343, %v1271
        %1347 = vrot.lane.b32.xlu0 %v1344, 32
        %v1348 = vpop.permute.xlu0 %1347
        %v1350 = vmul.f32 %v1343, %v1348
        %1352 = vrot.lane.b32.xlu0 %v1350, 32
        %v1353 = vpop.permute.xlu0 %1352
        %v1355 = vadd.f32 %v1345, %v1353
        %v1356 = vtanh.pop %v1355
        %1358 = vrot.lane.b32.xlu0 %v1356, 32
        %v1359 = vpop.permute.xlu0 %1358
        %v1361 = vmul.f32 %v1343, %v1359
        %1363 = vrot.lane.b32.xlu0 %v1361, 64
        %v1364 = vpop.permute.xlu0 %1363
        %v1365 = vsel %vm966, %v1364, 0
        %1367 = vmatpush.msra.mxu0 0.0
        %1368 = vmatpush.msra.mxu0 0.0
        %1369 = vmatpush.msra.mxu0 0.0
        %1370 = vmatpush.msra.mxu0 0.0
        %1371 = vmatpush.msra.mxu0 0.0
        %1372 = vmatpush.msra.mxu0 0.0
        %1373 = vmatpush.msra.mxu0 0.0
        %1374 = vmatpush.msra.mxu0 0.0
        %1375 = vmatpush.msra.mxu0 0.0
        %1376 = vmatpush.msra.mxu0 0.0
        %1377 = vmatpush.msra.mxu0 0.0
        %1378 = vmatpush.msra.mxu0 0.0
        %1379 = vmatpush.msra.mxu0 %v953
        %1380 = vmatpush.msra.mxu0 %v952
        %1381 = vmatpush.msra.mxu0 %v951
        %1382 = vmatpush.msra.mxu0 %v950
        %1383 = vmatmul.f32.gmra.mxu0 %v1365
        %v1384 = vpop.f32.mrf.mxu0
        %v1385 = vadd.f32 0.0, %v1384
        %1386 = vdwg.mxu0
        %v1387 = vadd.f32 %v1303, %v1385
        %1388 = vmatpush.msra.mxu0 0.0
        %1389 = vmatpush.msra.mxu0 0.0
        %1390 = vmatpush.msra.mxu0 0.0
        %1391 = vmatpush.msra.mxu0 0.0
        %1392 = vmatpush.msra.mxu0 0.0
        %1393 = vmatpush.msra.mxu0 0.0
        %1394 = vmatpush.msra.mxu0 0.0
        %1395 = vmatpush.msra.mxu0 0.0
        %1396 = vmatpush.msra.mxu0 0.0
        %1397 = vmatpush.msra.mxu0 0.0
        %1398 = vmatpush.msra.mxu0 0.0
        %1399 = vmatpush.msra.mxu0 0.0
        %1400 = vmatpush.msra.mxu0 %v933
        %1401 = vmatpush.msra.mxu0 %v932
        %1402 = vmatpush.msra.mxu0 %v931
        %1403 = vmatpush.msra.mxu0 %v930
        %1404 = vmatmul.f32.gmra.mxu0 %v1365
        %v1405 = vpop.f32.mrf.mxu0
        %v1406 = vadd.f32 0.0, %v1405
        %1407 = vdwg.mxu0
        %v1408 = vadd.f32 %v848, %v1406
        %v1409 = vxor.u32 %v1408, 2147483648
        %v1410 = vmul.f32 %v1409, 1.442695
        %v1411 = vpow.pop %v1410
        %v1412 = vadd.f32 %v1411, 1.0
        %v1413 = vrcp.pop %v1412
        %v1414 = vmul.f32 %v1412, %v1413
        %v1415 = vsub.f32 1.0, %v1414
        %v1416 = vmul.f32 %v1413, %v1415
        %v1417 = vadd.f32 %v1413, %v1416
        %vm1418 = vweird.f32 %v1412
        %vm1419 = vweird.f32 %v1413
        %vm1420 = vmor %vm1418, %vm1419
        %v1421 = vsel %vm1420, %v1413, %v1417
        %v1422 = vand.u32 2147483647, %v1412
        %vm1423 = vcmp.eq.f32.partialorder %v1422, 8.507059e+37
        %v1424 = vand.u32 %v1412, 2147483648
        %v1425 = vor.u32 1.1754944e-38, %v1424
        %v1426 = vsel %vm1423, %v1425, %v1421
        %v1427 = vmul.f32 1.0, %v1426
        %v1428 = vtanh.pop %v1408
        %v1429 = vmul.f32 %v1427, %v1355
        %1431 = vrot.lane.b32.xlu0 %v1428, 32
        %v1432 = vpop.permute.xlu0 %1431
        %v1434 = vmul.f32 %v1427, %v1432
        %1436 = vrot.lane.b32.xlu0 %v1434, 32
        %v1437 = vpop.permute.xlu0 %1436
        %v1439 = vadd.f32 %v1429, %v1437
        %v1440 = vtanh.pop %v1439
        %1442 = vrot.lane.b32.xlu0 %v1440, 32
        %v1443 = vpop.permute.xlu0 %1442
        %v1445 = vmul.f32 %v1427, %v1443
        %1447 = vrot.lane.b32.xlu0 %v1445, 64
        %v1448 = vpop.permute.xlu0 %1447
        %v1449 = vsel %vm966, %v1448, 0
        %1451 = vmatpush.msra.mxu0 0.0
        %1452 = vmatpush.msra.mxu0 0.0
        %1453 = vmatpush.msra.mxu0 0.0
        %1454 = vmatpush.msra.mxu0 0.0
        %1455 = vmatpush.msra.mxu0 0.0
        %1456 = vmatpush.msra.mxu0 0.0
        %1457 = vmatpush.msra.mxu0 0.0
        %1458 = vmatpush.msra.mxu0 0.0
        %1459 = vmatpush.msra.mxu0 0.0
        %1460 = vmatpush.msra.mxu0 0.0
        %1461 = vmatpush.msra.mxu0 0.0
        %1462 = vmatpush.msra.mxu0 0.0
        %1463 = vmatpush.msra.mxu0 %v957
        %1464 = vmatpush.msra.mxu0 %v956
        %1465 = vmatpush.msra.mxu0 %v955
        %1466 = vmatpush.msra.mxu0 %v954
        %1467 = vmatmul.f32.gmra.mxu0 %v1449
        %v1468 = vpop.f32.mrf.mxu0
        %v1469 = vadd.f32 0.0, %v1468
        %1470 = vdwg.mxu0
        %v1471 = vadd.f32 %v1387, %v1469
        %1472 = vmatpush.msra.mxu0 0.0
        %1473 = vmatpush.msra.mxu0 0.0
        %1474 = vmatpush.msra.mxu0 0.0
        %1475 = vmatpush.msra.mxu0 0.0
        %1476 = vmatpush.msra.mxu0 0.0
        %1477 = vmatpush.msra.mxu0 0.0
        %1478 = vmatpush.msra.mxu0 0.0
        %1479 = vmatpush.msra.mxu0 0.0
        %1480 = vmatpush.msra.mxu0 0.0
        %1481 = vmatpush.msra.mxu0 0.0
        %1482 = vmatpush.msra.mxu0 0.0
        %1483 = vmatpush.msra.mxu0 0.0
        %1484 = vmatpush.msra.mxu0 %v933
        %1485 = vmatpush.msra.mxu0 %v932
        %1486 = vmatpush.msra.mxu0 %v931
        %1487 = vmatpush.msra.mxu0 %v930
        %1488 = vmatmul.f32.gmra.mxu0 %v1449
        %v1489 = vpop.f32.mrf.mxu0
        %v1490 = vadd.f32 0.0, %v1489
        %1491 = vdwg.mxu0
        %v1492 = vadd.f32 %v888, %v1490
        %v1493 = vxor.u32 %v1492, 2147483648
        %v1494 = vmul.f32 %v1493, 1.442695
        %v1495 = vpow.pop %v1494
        %v1496 = vadd.f32 %v1495, 1.0
        %v1497 = vrcp.pop %v1496
        %v1498 = vmul.f32 %v1496, %v1497
        %v1499 = vsub.f32 1.0, %v1498
        %v1500 = vmul.f32 %v1497, %v1499
        %v1501 = vadd.f32 %v1497, %v1500
        %vm1502 = vweird.f32 %v1496
        %vm1503 = vweird.f32 %v1497
        %vm1504 = vmor %vm1502, %vm1503
        %v1505 = vsel %vm1504, %v1497, %v1501
        %v1506 = vand.u32 2147483647, %v1496
        %vm1507 = vcmp.eq.f32.partialorder %v1506, 8.507059e+37
        %v1508 = vand.u32 %v1496, 2147483648
        %v1509 = vor.u32 1.1754944e-38, %v1508
        %v1510 = vsel %vm1507, %v1509, %v1505
        %v1511 = vmul.f32 1.0, %v1510
        %v1512 = vtanh.pop %v1492
        %v1513 = vmul.f32 %v1511, %v1439
        %1515 = vrot.lane.b32.xlu0 %v1512, 32
        %v1516 = vpop.permute.xlu0 %1515
        %v1518 = vmul.f32 %v1511, %v1516
        %1520 = vrot.lane.b32.xlu0 %v1518, 32
        %v1521 = vpop.permute.xlu0 %1520
        %v1523 = vadd.f32 %v1513, %v1521
        %v1524 = vtanh.pop %v1523
        %1526 = vrot.lane.b32.xlu0 %v1524, 32
        %v1527 = vpop.permute.xlu0 %1526
        %v1529 = vmul.f32 %v1511, %v1527
        %1531 = vrot.lane.b32.xlu0 %v1529, 64
        %v1532 = vpop.permute.xlu0 %1531
        %v1533 = vsel %vm966, %v1532, 0
        %1535 = vmatpush.msra.mxu0 0.0
        %1536 = vmatpush.msra.mxu0 0.0
        %1537 = vmatpush.msra.mxu0 0.0
        %1538 = vmatpush.msra.mxu0 0.0
        %1539 = vmatpush.msra.mxu0 0.0
        %1540 = vmatpush.msra.mxu0 0.0
        %1541 = vmatpush.msra.mxu0 0.0
        %1542 = vmatpush.msra.mxu0 0.0
        %1543 = vmatpush.msra.mxu0 0.0
        %1544 = vmatpush.msra.mxu0 0.0
        %1545 = vmatpush.msra.mxu0 0.0
        %1546 = vmatpush.msra.mxu0 0.0
        %1547 = vmatpush.msra.mxu0 %v961
        %1548 = vmatpush.msra.mxu0 %v960
        %1549 = vmatpush.msra.mxu0 %v959
        %1550 = vmatpush.msra.mxu0 %v958
        %1551 = vmatmul.f32.gmra.mxu0 %v1533
        %v1552 = vpop.f32.mrf.mxu0
        %v1553 = vadd.f32 0.0, %v1552
        %1554 = vdwg.mxu0
        %v1555 = vadd.f32 %v1471, %v1553
        %1556 = vmatpush.msra.mxu0 0.0
        %1557 = vmatpush.msra.mxu0 0.0
        %1558 = vmatpush.msra.mxu0 0.0
        %1559 = vmatpush.msra.mxu0 0.0
        %1560 = vmatpush.msra.mxu0 0.0
        %1561 = vmatpush.msra.mxu0 0.0
        %1562 = vmatpush.msra.mxu0 0.0
        %1563 = vmatpush.msra.mxu0 0.0
        %1564 = vmatpush.msra.mxu0 0.0
        %1565 = vmatpush.msra.mxu0 0.0
        %1566 = vmatpush.msra.mxu0 0.0
        %1567 = vmatpush.msra.mxu0 0.0
        %1568 = vmatpush.msra.mxu0 %v933
        %1569 = vmatpush.msra.mxu0 %v932
        %1570 = vmatpush.msra.mxu0 %v931
        %1571 = vmatpush.msra.mxu0 %v930
        %1572 = vmatmul.f32.gmra.mxu0 %v1533
        %v1573 = vpop.f32.mrf.mxu0
        %v1574 = vadd.f32 0.0, %v1573
        %1575 = vdwg.mxu0
        %v1576 = vadd.f32 %v928, %v1574
        %v1577 = vxor.u32 %v1576, 2147483648
        %v1578 = vmul.f32 %v1577, 1.442695
        %v1579 = vpow.pop %v1578
        %v1580 = vadd.f32 %v1579, 1.0
        %v1581 = vrcp.pop %v1580
        %v1582 = vmul.f32 %v1580, %v1581
        %v1583 = vsub.f32 1.0, %v1582
        %v1584 = vmul.f32 %v1581, %v1583
        %v1585 = vadd.f32 %v1581, %v1584
        %vm1586 = vweird.f32 %v1580
        %vm1587 = vweird.f32 %v1581
        %vm1588 = vmor %vm1586, %vm1587
        %v1589 = vsel %vm1588, %v1581, %v1585
        %v1590 = vand.u32 2147483647, %v1580
        %vm1591 = vcmp.eq.f32.partialorder %v1590, 8.507059e+37
        %v1592 = vand.u32 %v1580, 2147483648
        %v1593 = vor.u32 1.1754944e-38, %v1592
        %v1594 = vsel %vm1591, %v1593, %v1589
        %v1595 = vmul.f32 1.0, %v1594
        %v1596 = vtanh.pop %v1576
        %v1597 = vmul.f32 %v1595, %v1523
        %1599 = vrot.lane.b32.xlu0 %v1596, 32
        %v1600 = vpop.permute.xlu0 %1599
        %v1602 = vmul.f32 %v1595, %v1600
        %1604 = vrot.lane.b32.xlu0 %v1602, 32
        %v1605 = vpop.permute.xlu0 %1604
        %v1607 = vadd.f32 %v1597, %v1605
        %v1608 = vtanh.pop %v1607
        %1610 = vrot.lane.b32.xlu0 %v1608, 32
        %v1611 = vpop.permute.xlu0 %1610
        %v1613 = vmul.f32 %v1595, %v1611
        %1615 = vrot.lane.b32.xlu0 %v1613, 64
        %v1616 = vpop.permute.xlu0 %1615
        %v1617 = vsel %vm966, %v1616, 0
        %1619 = vmatpush.msra.mxu0 0.0
        %1620 = vmatpush.msra.mxu0 0.0
        %1621 = vmatpush.msra.mxu0 0.0
        %1622 = vmatpush.msra.mxu0 0.0
        %1623 = vmatpush.msra.mxu0 0.0
        %1624 = vmatpush.msra.mxu0 0.0
        %1625 = vmatpush.msra.mxu0 0.0
        %1626 = vmatpush.msra.mxu0 0.0
        %1627 = vmatpush.msra.mxu0 0.0
        %1628 = vmatpush.msra.mxu0 0.0
        %1629 = vmatpush.msra.mxu0 0.0
        %1630 = vmatpush.msra.mxu0 0.0
        %1631 = vmatpush.msra.mxu0 %v965
        %1632 = vmatpush.msra.mxu0 %v964
        %1633 = vmatpush.msra.mxu0 %v963
        %1634 = vmatpush.msra.mxu0 %v962
        %1635 = vmatmul.f32.gmra.mxu0 %v1617
        %v1636 = vpop.f32.mrf.mxu0
        %v1637 = vadd.f32 0.0, %v1636
        %1638 = vdwg.mxu0
        %v1639 = vadd.f32 %v1555, %v1637
        %v1640 = vld [vmem:[%s5] sm:$0x1]
        %v1642 = vperm.slane %v1640, 0
        %v1644 = vadd.f32 %v1639, %v1642
        %1645 = vst [vmem:[%s333] sm:$0xff] %v1644
        %s1646 = sand.u32 %s164, 1
        %s1647 = scalar_lea.sflag [#allocation4], %s1646
        %s1648 = sand.u32 %s164, 1
        %s1649 = smul.addr %s1648, 8
        %s1650 = scalar_lea.vmem [#allocation11], %s1649
        // Predicated region
        $region65: #{tpu_custom_call.1} parent=43 // pred_check
          %p1651 = pneg %p174
        $region66: #{tpu_custom_call.1} parent=43 // pred_check_branch
          %1653 = sbr.rel (%p1651) target = $region68
        $region67: #{tpu_custom_call.1} parent=43 // pred_region
          %1655 = vsyncadd %s1647, 0
          %s1656 = smul.addr %s25, 8
          %s1657 = scalar_lea.hbm %s6, %s1656
          %s1659 = sshll.u32 %s1650, 4
          %s1660 = int_to_ptr.vmem [resolvable:$true] %s1659
          %s1661 = sshll.u32 %s1657, 4
          %s1662 = int_to_ptr.hbm [resolvable:$true] %s1661
          %1664 = dma.vmem_to_hbm [thread:$0]  %s1660, 128, %s1662, %s1647
        $region68: #{tpu_custom_call.1} parent=43 // pred_fallthru
          _
      $region44: #{tpu_custom_call.1} parent=5 // pred_fallthru
        _
      %p1665 = scmp.le.s32.totalorder 2, %s20
      // Predicated region
      $region69: #{tpu_custom_call.1} parent=5 // pred_check
        %p1666 = pneg %p1665
      $region70: #{tpu_custom_call.1} parent=5 // pred_check_branch
        %1668 = sbr.rel (%p1666) target = $region72
      $region71: #{tpu_custom_call.1} parent=5 // pred_region
        %s1669 = ssub.s32 %s20, 2
        // Predicated region
        $region73: #{tpu_custom_call.1} parent=71 // pred_check
          %p1670 = pneg %p180
        $region74: #{tpu_custom_call.1} parent=71 // pred_check_branch
          %1672 = sbr.rel (%p1670) target = $region76
        $region75: #{tpu_custom_call.1} parent=71 // pred_region
          %s1673 = sand.u32 %s165, 1
          %s1674 = scalar_lea.sflag [#allocation4], %s1673
          %s1675 = sand.u32 %s165, 1
          %s1676 = smul.addr %s1675, 8
          %s1677 = scalar_lea.vmem [#allocation11], %s1676
          %1679 = dma.done %s1674, 128
        $region76: #{tpu_custom_call.1} parent=71 // pred_fallthru
          _
      $region72: #{tpu_custom_call.1} parent=5 // pred_fallthru
        _
    $region6: #{tpu_custom_call.1} parent=1 // loop_footer
      %s24 = sadd.s32 1, %s20
    $region7: #{tpu_custom_call.1} parent=1 // loop_footer_branch
      %19 = sbr.rel target = $region3
    $region8: #{tpu_custom_call.1} parent=1 // loop_exit
      _
    %1680 = vsyncpa [#allocation3], 1
    %s1681 = scalar_lea.sflag [#allocation3], 1
    %1682 = vsyncpa %s1681, 1
    %1683 = vsyncpa [#allocation6], 1
    %1684 = vsyncpa [#allocation9], 1
    %1685 = vsyncpa [#allocation4], 1
    %s1686 = scalar_lea.sflag [#allocation4], 1
    %1687 = vsyncpa %s1686, 1

</llo_original>
